<compile_context>
chip_gen: v6e
topology: v6e:2x2x1
jax: 0.10.0
libtpu: 0.0.40
codegen_flags: <defaults>
</compile_context>

<pallas_src>
import functools

import jax
import jax.numpy as jnp
from jax.experimental import pallas as pl
from jax.experimental.pallas import tpu as pltpu

NUM_HIDDENS = 256
NUM_HEADS = 4
HEAD_DIM = NUM_HIDDENS // NUM_HEADS          # 64
NEG_BIAS = -1e30                             # finite stand-in for -inf


# ----------------------------------------------------------------------------
# Kernel: one batch element per grid step, everything for that batch in VMEM
# ----------------------------------------------------------------------------
def _cross_attn_kernel(xq_ref, xkv_ref, mask_ref, wq_ref, wkv_ref, wo_ref, out_ref):
    """Shapes (per grid step b):
      xq_ref   [1, Sq, D]   query-side activations (f32)
      xkv_ref  [1, Sk, D]   key/value-side activations (f32)
      mask_ref [1, Sq, Sk]  I_m block for this batch (0 => masked)
      wq_ref   [D, D]       Wq^T with 1/sqrt(Hd) folded in (bf16)
      wkv_ref  [D, 2D]      [Wk^T | Wv^T]            (bf16)
      wo_ref   [D, D]       Wo^T                      (bf16)
      out_ref  [1, Sq, D]   f32 output block
    """
    D, H, Hd = NUM_HIDDENS, NUM_HEADS, HEAD_DIM

    xq = xq_ref[0].astype(jnp.bfloat16)      # [Sq, D]
    xkv = xkv_ref[0].astype(jnp.bfloat16)    # [Sk, D]

    # Lane-dense, full-width MXU projections (f32 accumulate).
    q = jnp.dot(xq, wq_ref[...], preferred_element_type=jnp.float32)      # [Sq, D] (pre-scaled)
    kv = jnp.dot(xkv, wkv_ref[...], preferred_element_type=jnp.float32)   # [Sk, 2D]
    k = kv[:, :D]
    v = kv[:, D:]

    # Additive mask bias built in-kernel from the compact per-batch mask block.
    bias = jnp.where(mask_ref[0] == 0.0, jnp.float32(NEG_BIAS), jnp.float32(0.0))  # [Sq, Sk]

    q = q.astype(jnp.bfloat16)
    k = k.astype(jnp.bfloat16)
    v = v.astype(jnp.bfloat16)

    o_heads = []
    for h in range(H):                        # static unroll, 2-D ops only
        sl = slice(h * Hd, (h + 1) * Hd)
        s = jnp.einsum("qd,kd->qk", q[:, sl], k[:, sl],
                       preferred_element_type=jnp.float32)                 # [Sq, Sk] f32
        s = s + bias
        m = jnp.max(s, axis=-1, keepdims=True)
        p = jnp.exp(s - m)                                                  # unnormalized probs
        denom = jnp.sum(p, axis=-1, keepdims=True)
        o_h = jnp.dot(p.astype(jnp.bfloat16), v[:, sl],
                      preferred_element_type=jnp.float32)                   # [Sq, Hd]
        # Normalize AFTER P@V (Hd-wide instead of Sk-wide); reciprocal on the EUP slot.
        o_heads.append(o_h * pl.reciprocal(denom, approx=True))

    # Head-concat (matches transpose_o ordering) + single K=256 output projection.
    o = jnp.concatenate(o_heads, axis=-1).astype(jnp.bfloat16)              # [Sq, D]
    out_ref[0] = jnp.dot(o, wo_ref[...], preferred_element_type=jnp.float32)


# ----------------------------------------------------------------------------
# Wrappers
# ----------------------------------------------------------------------------
def prepare_params(wq, wk, wv, wo):
    """One-time re-layout of PyTorch-convention [out, in] weights for the kernel."""
    scale = 1.0 / (HEAD_DIM ** 0.5)
    return {
        "wq_t": (wq.T * scale).astype(jnp.bfloat16),                           # [D, D]
        "wkv_t": jnp.concatenate([wk.T, wv.T], axis=1).astype(jnp.bfloat16),   # [D, 2D]
        "wo_t": wo.T.astype(jnp.bfloat16),                                     # [D, D]
    }


def cross_attention_block(prepared, X, X_en, I_m):
    """X: [B, Sq, D], X_en: [B, Sk, D], I_m: [B, Sq, Sk] (0 => masked)."""
    B, Sq, D = X.shape
    Sk = X_en.shape[1]

    return pl.pallas_call(
        _cross_attn_kernel,
        out_shape=jax.ShapeDtypeStruct((B, Sq, D), jnp.float32),
        grid=(B,),
        in_specs=[
            pl.BlockSpec((1, Sq, D), lambda b: (b, 0, 0)),
            pl.BlockSpec((1, Sk, D), lambda b: (b, 0, 0)),
            pl.BlockSpec((1, Sq, Sk), lambda b: (b, 0, 0)),
            pl.BlockSpec((D, D), lambda b: (0, 0)),
            pl.BlockSpec((D, 2 * D), lambda b: (0, 0)),
            pl.BlockSpec((D, D), lambda b: (0, 0)),
        ],
        out_specs=pl.BlockSpec((1, Sq, D), lambda b: (b, 0, 0)),
        compiler_params=pltpu.CompilerParams(dimension_semantics=("parallel",)),
    )(X.astype(jnp.float32), X_en.astype(jnp.float32), I_m.astype(jnp.float32),
      prepared["wq_t"], prepared["wkv_t"], prepared["wo_t"])


# ----------------------------------------------------------------------------
# Pure-JAX reference (mirrors the PyTorch module) and a deterministic driver
# ----------------------------------------------------------------------------
def cross_attention_ref(wq, wk, wv, wo, X, X_en, I_m):
    Q, K, V = X @ wq.T, X_en @ wk.T, X_en @ wv.T

    def split(t):
        B, S, _ = t.shape
        return t.reshape(B, S, NUM_HEADS, HEAD_DIM).transpose(0, 2, 1, 3)

    Qh, Kh, Vh = split(Q), split(K), split(V)
    A = jnp.einsum("bhqd,bhkd->bhqk", Qh, Kh) / (HEAD_DIM ** 0.5)
    A = jnp.where(I_m[:, None, :, :] == 0, -jnp.inf, A)
    P = jax.nn.softmax(A, axis=-1)
    O = jnp.einsum("bhqk,bhkd->bhqd", P, Vh)
    O = O.transpose(0, 2, 1, 3).reshape(X.shape[0], X.shape[1], NUM_HIDDENS)
    return O @ wo.T


def init_weights(key):
    ks = jax.random.split(key, 4)

    def lin(k):
        return jax.random.normal(k, (NUM_HIDDENS, NUM_HIDDENS), jnp.float32) * 0.02

    return lin(ks[0]), lin(ks[1]), lin(ks[2]), lin(ks[3])


if __name__ == "__main__":
    key = jax.random.PRNGKey(0)
    kw, kx, ke, km = jax.random.split(key, 4)
    B, Sq, Sk = 2, 8, 8

    wq, wk, wv, wo = init_weights(kw)
    prepared = prepare_params(wq, wk, wv, wo)

    X = jax.random.normal(kx, (B, Sq, NUM_HIDDENS), jnp.float32)
    X_en = jax.random.normal(ke, (B, Sk, NUM_HIDDENS), jnp.float32)
    # Key-padding-style mask broadcast over queries (1 = attend, 0 = masked);
    # keep at least one key per batch so the -inf reference is well-defined.
    key_keep = (jax.random.uniform(km, (B, Sk)) > 0.2).astype(jnp.float32)
    key_keep = key_keep.at[:, 0].set(1.0)
    I_m = jnp.broadcast_to(key_keep[:, None, :], (B, Sq, Sk))

    fwd = jax.jit(functools.partial(cross_attention_block, prepared))
    out = jax.block_until_ready(fwd(X, X_en, I_m))

    assert out.shape == (B, Sq, NUM_HIDDENS), out.shape
    assert bool(jnp.all(jnp.isfinite(out)))

    ref = cross_attention_ref(wq, wk, wv, wo, X, X_en, I_m)
    err = float(jnp.max(jnp.abs(out - ref)))
    assert err < 2e-2, f"max abs err {err}"   # bf16 matmul operands; f32 softmax/accum
    print("KERNEL_OK")
</pallas_src>

<mosaic_0001>
module attributes {stable_mosaic.version = 11 : i64} {
  func.func @_cross_attn_kernel(%arg0: i32, %arg1: memref<1x8x256xf32, #tpu.memory_space<vmem>>, %arg2: memref<1x8x256xf32, #tpu.memory_space<vmem>>, %arg3: memref<1x8x8xf32, #tpu.memory_space<vmem>>, %arg4: memref<256x256xbf16, #tpu.memory_space<vmem>>, %arg5: memref<256x512xbf16, #tpu.memory_space<vmem>>, %arg6: memref<256x256xbf16, #tpu.memory_space<vmem>>, %arg7: memref<1x8x256xf32, #tpu.memory_space<vmem>>) attributes {dimension_semantics = [#tpu.dimension_semantics<parallel>], iteration_bounds = array<i64: 2>, scalar_prefetch = 0 : i64, scratch_operands = 0 : i64, tpu.core_type = #tpu.core_type<tc>, window_params = [{transform_indices = @transform_0, window_bounds = array<i64: 1, 8, 256>}, {transform_indices = @transform_1, window_bounds = array<i64: 1, 8, 256>}, {transform_indices = @transform_2, window_bounds = array<i64: 1, 8, 8>}, {pipeline_mode = #tpu.pipeline_mode<synchronous>, transform_indices = @transform_3, window_bounds = array<i64: 256, 256>}, {pipeline_mode = #tpu.pipeline_mode<synchronous>, transform_indices = @transform_4, window_bounds = array<i64: 256, 512>}, {pipeline_mode = #tpu.pipeline_mode<synchronous>, transform_indices = @transform_5, window_bounds = array<i64: 256, 256>}, {transform_indices = @transform_6, window_bounds = array<i64: 1, 8, 256>}]} {
    %c0 = arith.constant 0 : index
    %c0_0 = arith.constant 0 : index
    %c0_1 = arith.constant 0 : index
    %0 = vector.load %arg1[%c0, %c0_0, %c0_1] : memref<1x8x256xf32, #tpu.memory_space<vmem>>, vector<1x8x256xf32>
    %1 = vector.shape_cast %0 : vector<1x8x256xf32> to vector<8x256xf32>
    %2 = arith.truncf %1 : vector<8x256xf32> to vector<8x256xbf16>
    %c0_2 = arith.constant 0 : index
    %c0_3 = arith.constant 0 : index
    %c0_4 = arith.constant 0 : index
    %3 = vector.load %arg2[%c0_2, %c0_3, %c0_4] : memref<1x8x256xf32, #tpu.memory_space<vmem>>, vector<1x8x256xf32>
    %4 = vector.shape_cast %3 : vector<1x8x256xf32> to vector<8x256xf32>
    %5 = arith.truncf %4 : vector<8x256xf32> to vector<8x256xbf16>
    %c0_5 = arith.constant 0 : index
    %c0_6 = arith.constant 0 : index
    %6 = vector.load %arg4[%c0_5, %c0_6] : memref<256x256xbf16, #tpu.memory_space<vmem>>, vector<256x256xbf16>
    %cst = arith.constant dense<0.000000e+00> : vector<8x256xf32>
    %7 = tpu.matmul %2, %6, %cst {dimension_numbers = #tpu.dot_dimension_numbers<[1], [0], [0], [1], [0, 0, 1, 1], [], []>} : vector<8x256xbf16>, vector<256x256xbf16>, vector<8x256xf32> -> vector<8x256xf32>
    %c0_7 = arith.constant 0 : index
    %c0_8 = arith.constant 0 : index
    %8 = vector.load %arg5[%c0_7, %c0_8] : memref<256x512xbf16, #tpu.memory_space<vmem>>, vector<256x512xbf16>
    %cst_9 = arith.constant dense<0.000000e+00> : vector<8x512xf32>
    %9 = tpu.matmul %5, %8, %cst_9 {dimension_numbers = #tpu.dot_dimension_numbers<[1], [0], [0], [1], [0, 0, 1, 1], [], []>} : vector<8x256xbf16>, vector<256x512xbf16>, vector<8x512xf32> -> vector<8x512xf32>
    %10 = vector.extract_strided_slice %9 {offsets = [0, 0], sizes = [8, 256], strides = [1, 1]} : vector<8x512xf32> to vector<8x256xf32>
    %11 = vector.extract_strided_slice %9 {offsets = [0, 256], sizes = [8, 256], strides = [1, 1]} : vector<8x512xf32> to vector<8x256xf32>
    %c0_10 = arith.constant 0 : index
    %c0_11 = arith.constant 0 : index
    %c0_12 = arith.constant 0 : index
    %12 = vector.load %arg3[%c0_10, %c0_11, %c0_12] : memref<1x8x8xf32, #tpu.memory_space<vmem>>, vector<1x8x8xf32>
    %13 = vector.shape_cast %12 : vector<1x8x8xf32> to vector<8x8xf32>
    %cst_13 = arith.constant 0.000000e+00 : f32
    %14 = vector.broadcast %cst_13 : f32 to vector<8x8xf32>
    %15 = arith.cmpf oeq, %13, %14 : vector<8x8xf32>
    %cst_14 = arith.constant -1.000000e+30 : f32
    %cst_15 = arith.constant 0.000000e+00 : f32
    %16 = vector.broadcast %cst_14 : f32 to vector<8x8xf32>
    %17 = vector.broadcast %cst_15 : f32 to vector<8x8xf32>
    %18 = arith.select %15, %16, %17 : vector<8x8xi1>, vector<8x8xf32>
    %19 = arith.truncf %7 : vector<8x256xf32> to vector<8x256xbf16>
    %20 = arith.truncf %10 : vector<8x256xf32> to vector<8x256xbf16>
    %21 = arith.truncf %11 : vector<8x256xf32> to vector<8x256xbf16>
    %22 = vector.extract_strided_slice %19 {offsets = [0, 0], sizes = [8, 64], strides = [1, 1]} : vector<8x256xbf16> to vector<8x64xbf16>
    %23 = vector.extract_strided_slice %20 {offsets = [0, 0], sizes = [8, 64], strides = [1, 1]} : vector<8x256xbf16> to vector<8x64xbf16>
    "tpu.trace_start"() <{level = 10 : i32, message = "qd,kd->qk"}> : () -> ()
    %cst_16 = arith.constant dense<0.000000e+00> : vector<8x8xf32>
    %24 = tpu.matmul %22, %23, %cst_16 {dimension_numbers = #tpu.dot_dimension_numbers<[1], [1], [0], [0], [0, 0, 1, 0], [], []>} : vector<8x64xbf16>, vector<8x64xbf16>, vector<8x8xf32> -> vector<8x8xf32>
    "tpu.trace_stop"() : () -> ()
    %25 = arith.addf %24, %18 : vector<8x8xf32>
    %cst_17 = arith.constant dense<0xFF800000> : vector<8xf32>
    %26 = vector.multi_reduction <maximumf>, %25, %cst_17 [1] : vector<8x8xf32> to vector<8xf32>
    %27 = vector.shape_cast %26 : vector<8xf32> to vector<8x1xf32>
    %28 = vector.broadcast %27 : vector<8x1xf32> to vector<8x8xf32>
    %29 = arith.subf %25, %28 : vector<8x8xf32>
    %30 = math.exp %29 : vector<8x8xf32>
    %cst_18 = arith.constant dense<0.000000e+00> : vector<8xf32>
    %31 = vector.multi_reduction <add>, %30, %cst_18 [1] : vector<8x8xf32> to vector<8xf32>
    %32 = vector.shape_cast %31 : vector<8xf32> to vector<8x1xf32>
    %33 = arith.truncf %30 : vector<8x8xf32> to vector<8x8xbf16>
    %34 = vector.extract_strided_slice %21 {offsets = [0, 0], sizes = [8, 64], strides = [1, 1]} : vector<8x256xbf16> to vector<8x64xbf16>
    %cst_19 = arith.constant dense<0.000000e+00> : vector<8x64xf32>
    %35 = tpu.matmul %33, %34, %cst_19 {dimension_numbers = #tpu.dot_dimension_numbers<[1], [0], [0], [1], [0, 0, 1, 1], [], []>} : vector<8x8xbf16>, vector<8x64xbf16>, vector<8x64xf32> -> vector<8x64xf32>
    %36 = tpu.reciprocal %32 {approx = true} : vector<8x1xf32> -> vector<8x1xf32>
    %37 = vector.broadcast %36 : vector<8x1xf32> to vector<8x64xf32>
    %38 = arith.mulf %35, %37 : vector<8x64xf32>
    %39 = vector.extract_strided_slice %19 {offsets = [0, 64], sizes = [8, 64], strides = [1, 1]} : vector<8x256xbf16> to vector<8x64xbf16>
    %40 = vector.extract_strided_slice %20 {offsets = [0, 64], sizes = [8, 64], strides = [1, 1]} : vector<8x256xbf16> to vector<8x64xbf16>
    "tpu.trace_start"() <{level = 10 : i32, message = "qd,kd->qk"}> : () -> ()
    %cst_20 = arith.constant dense<0.000000e+00> : vector<8x8xf32>
    %41 = tpu.matmul %39, %40, %cst_20 {dimension_numbers = #tpu.dot_dimension_numbers<[1], [1], [0], [0], [0, 0, 1, 0], [], []>} : vector<8x64xbf16>, vector<8x64xbf16>, vector<8x8xf32> -> vector<8x8xf32>
    "tpu.trace_stop"() : () -> ()
    %42 = arith.addf %41, %18 : vector<8x8xf32>
    %cst_21 = arith.constant dense<0xFF800000> : vector<8xf32>
    %43 = vector.multi_reduction <maximumf>, %42, %cst_21 [1] : vector<8x8xf32> to vector<8xf32>
    %44 = vector.shape_cast %43 : vector<8xf32> to vector<8x1xf32>
    %45 = vector.broadcast %44 : vector<8x1xf32> to vector<8x8xf32>
    %46 = arith.subf %42, %45 : vector<8x8xf32>
    %47 = math.exp %46 : vector<8x8xf32>
    %cst_22 = arith.constant dense<0.000000e+00> : vector<8xf32>
    %48 = vector.multi_reduction <add>, %47, %cst_22 [1] : vector<8x8xf32> to vector<8xf32>
    %49 = vector.shape_cast %48 : vector<8xf32> to vector<8x1xf32>
    %50 = arith.truncf %47 : vector<8x8xf32> to vector<8x8xbf16>
    %51 = vector.extract_strided_slice %21 {offsets = [0, 64], sizes = [8, 64], strides = [1, 1]} : vector<8x256xbf16> to vector<8x64xbf16>
    %cst_23 = arith.constant dense<0.000000e+00> : vector<8x64xf32>
    %52 = tpu.matmul %50, %51, %cst_23 {dimension_numbers = #tpu.dot_dimension_numbers<[1], [0], [0], [1], [0, 0, 1, 1], [], []>} : vector<8x8xbf16>, vector<8x64xbf16>, vector<8x64xf32> -> vector<8x64xf32>
    %53 = tpu.reciprocal %49 {approx = true} : vector<8x1xf32> -> vector<8x1xf32>
    %54 = vector.broadcast %53 : vector<8x1xf32> to vector<8x64xf32>
    %55 = arith.mulf %52, %54 : vector<8x64xf32>
    %56 = vector.extract_strided_slice %19 {offsets = [0, 128], sizes = [8, 64], strides = [1, 1]} : vector<8x256xbf16> to vector<8x64xbf16>
    %57 = vector.extract_strided_slice %20 {offsets = [0, 128], sizes = [8, 64], strides = [1, 1]} : vector<8x256xbf16> to vector<8x64xbf16>
    "tpu.trace_start"() <{level = 10 : i32, message = "qd,kd->qk"}> : () -> ()
    %cst_24 = arith.constant dense<0.000000e+00> : vector<8x8xf32>
    %58 = tpu.matmul %56, %57, %cst_24 {dimension_numbers = #tpu.dot_dimension_numbers<[1], [1], [0], [0], [0, 0, 1, 0], [], []>} : vector<8x64xbf16>, vector<8x64xbf16>, vector<8x8xf32> -> vector<8x8xf32>
    "tpu.trace_stop"() : () -> ()
    %59 = arith.addf %58, %18 : vector<8x8xf32>
    %cst_25 = arith.constant dense<0xFF800000> : vector<8xf32>
    %60 = vector.multi_reduction <maximumf>, %59, %cst_25 [1] : vector<8x8xf32> to vector<8xf32>
    %61 = vector.shape_cast %60 : vector<8xf32> to vector<8x1xf32>
    %62 = vector.broadcast %61 : vector<8x1xf32> to vector<8x8xf32>
    %63 = arith.subf %59, %62 : vector<8x8xf32>
    %64 = math.exp %63 : vector<8x8xf32>
    %cst_26 = arith.constant dense<0.000000e+00> : vector<8xf32>
    %65 = vector.multi_reduction <add>, %64, %cst_26 [1] : vector<8x8xf32> to vector<8xf32>
    %66 = vector.shape_cast %65 : vector<8xf32> to vector<8x1xf32>
    %67 = arith.truncf %64 : vector<8x8xf32> to vector<8x8xbf16>
    %68 = vector.extract_strided_slice %21 {offsets = [0, 128], sizes = [8, 64], strides = [1, 1]} : vector<8x256xbf16> to vector<8x64xbf16>
    %cst_27 = arith.constant dense<0.000000e+00> : vector<8x64xf32>
    %69 = tpu.matmul %67, %68, %cst_27 {dimension_numbers = #tpu.dot_dimension_numbers<[1], [0], [0], [1], [0, 0, 1, 1], [], []>} : vector<8x8xbf16>, vector<8x64xbf16>, vector<8x64xf32> -> vector<8x64xf32>
    %70 = tpu.reciprocal %66 {approx = true} : vector<8x1xf32> -> vector<8x1xf32>
    %71 = vector.broadcast %70 : vector<8x1xf32> to vector<8x64xf32>
    %72 = arith.mulf %69, %71 : vector<8x64xf32>
    %73 = vector.extract_strided_slice %19 {offsets = [0, 192], sizes = [8, 64], strides = [1, 1]} : vector<8x256xbf16> to vector<8x64xbf16>
    %74 = vector.extract_strided_slice %20 {offsets = [0, 192], sizes = [8, 64], strides = [1, 1]} : vector<8x256xbf16> to vector<8x64xbf16>
    "tpu.trace_start"() <{level = 10 : i32, message = "qd,kd->qk"}> : () -> ()
    %cst_28 = arith.constant dense<0.000000e+00> : vector<8x8xf32>
    %75 = tpu.matmul %73, %74, %cst_28 {dimension_numbers = #tpu.dot_dimension_numbers<[1], [1], [0], [0], [0, 0, 1, 0], [], []>} : vector<8x64xbf16>, vector<8x64xbf16>, vector<8x8xf32> -> vector<8x8xf32>
    "tpu.trace_stop"() : () -> ()
    %76 = arith.addf %75, %18 : vector<8x8xf32>
    %cst_29 = arith.constant dense<0xFF800000> : vector<8xf32>
    %77 = vector.multi_reduction <maximumf>, %76, %cst_29 [1] : vector<8x8xf32> to vector<8xf32>
    %78 = vector.shape_cast %77 : vector<8xf32> to vector<8x1xf32>
    %79 = vector.broadcast %78 : vector<8x1xf32> to vector<8x8xf32>
    %80 = arith.subf %76, %79 : vector<8x8xf32>
    %81 = math.exp %80 : vector<8x8xf32>
    %cst_30 = arith.constant dense<0.000000e+00> : vector<8xf32>
    %82 = vector.multi_reduction <add>, %81, %cst_30 [1] : vector<8x8xf32> to vector<8xf32>
    %83 = vector.shape_cast %82 : vector<8xf32> to vector<8x1xf32>
    %84 = arith.truncf %81 : vector<8x8xf32> to vector<8x8xbf16>
    %85 = vector.extract_strided_slice %21 {offsets = [0, 192], sizes = [8, 64], strides = [1, 1]} : vector<8x256xbf16> to vector<8x64xbf16>
    %cst_31 = arith.constant dense<0.000000e+00> : vector<8x64xf32>
    %86 = tpu.matmul %84, %85, %cst_31 {dimension_numbers = #tpu.dot_dimension_numbers<[1], [0], [0], [1], [0, 0, 1, 1], [], []>} : vector<8x8xbf16>, vector<8x64xbf16>, vector<8x64xf32> -> vector<8x64xf32>
    %87 = tpu.reciprocal %83 {approx = true} : vector<8x1xf32> -> vector<8x1xf32>
    %88 = vector.broadcast %87 : vector<8x1xf32> to vector<8x64xf32>
    %89 = arith.mulf %86, %88 : vector<8x64xf32>
    %90 = tpu.concatenate %38, %55, %72, %89 in 1 : vector<8x64xf32>, vector<8x64xf32>, vector<8x64xf32>, vector<8x64xf32> -> vector<8x256xf32>
    %91 = arith.truncf %90 : vector<8x256xf32> to vector<8x256xbf16>
    %c0_32 = arith.constant 0 : index
    %c0_33 = arith.constant 0 : index
    %92 = vector.load %arg6[%c0_32, %c0_33] : memref<256x256xbf16, #tpu.memory_space<vmem>>, vector<256x256xbf16>
    %cst_34 = arith.constant dense<0.000000e+00> : vector<8x256xf32>
    %93 = tpu.matmul %91, %92, %cst_34 {dimension_numbers = #tpu.dot_dimension_numbers<[1], [0], [0], [1], [0, 0, 1, 1], [], []>} : vector<8x256xbf16>, vector<256x256xbf16>, vector<8x256xf32> -> vector<8x256xf32>
    %c0_35 = arith.constant 0 : index
    %c0_36 = arith.constant 0 : index
    %c0_37 = arith.constant 0 : index
    %94 = vector.load %arg7[%c0_35, %c0_36, %c0_37] : memref<1x8x256xf32, #tpu.memory_space<vmem>>, vector<1x8x256xf32>
    %95 = vector.shape_cast %94 : vector<1x8x256xf32> to vector<8x256xf32>
    %96 = vector.shape_cast %93 : vector<8x256xf32> to vector<1x8x256xf32>
    tpu.vector_store %arg7[%c0_35, %c0_36, %c0_37], %96 {strides = array<i32>} : memref<1x8x256xf32, #tpu.memory_space<vmem>>, vector<1x8x256xf32>,
    return
  }
  func.func @transform_0(%arg0: i32) -> (i32, i32, i32) {
    %c0_i32 = arith.constant 0 : i32
    %c0_i32_0 = arith.constant 0 : i32
    %c0_i32_1 = arith.constant 0 : i32
    return %arg0, %c0_i32, %c0_i32_0 : i32, i32, i32
  }
  func.func @transform_1(%arg0: i32) -> (i32, i32, i32) {
    %c0_i32 = arith.constant 0 : i32
    %c0_i32_0 = arith.constant 0 : i32
    %c0_i32_1 = arith.constant 0 : i32
    return %arg0, %c0_i32, %c0_i32_0 : i32, i32, i32
  }
  func.func @transform_2(%arg0: i32) -> (i32, i32, i32) {
    %c0_i32 = arith.constant 0 : i32
    %c0_i32_0 = arith.constant 0 : i32
    %c0_i32_1 = arith.constant 0 : i32
    return %arg0, %c0_i32, %c0_i32_0 : i32, i32, i32
  }
  func.func @transform_3(%arg0: i32) -> (i32, i32) {
    %c0_i32 = arith.constant 0 : i32
    %c0_i32_0 = arith.constant 0 : i32
    %c0_i32_1 = arith.constant 0 : i32
    return %c0_i32, %c0_i32_0 : i32, i32
  }
  func.func @transform_4(%arg0: i32) -> (i32, i32) {
    %c0_i32 = arith.constant 0 : i32
    %c0_i32_0 = arith.constant 0 : i32
    %c0_i32_1 = arith.constant 0 : i32
    return %c0_i32, %c0_i32_0 : i32, i32
  }
  func.func @transform_5(%arg0: i32) -> (i32, i32) {
    %c0_i32 = arith.constant 0 : i32
    %c0_i32_0 = arith.constant 0 : i32
    %c0_i32_1 = arith.constant 0 : i32
    return %c0_i32, %c0_i32_0 : i32, i32
  }
  func.func @transform_6(%arg0: i32) -> (i32, i32, i32) {
    %c0_i32 = arith.constant 0 : i32
    %c0_i32_0 = arith.constant 0 : i32
    %c0_i32_1 = arith.constant 0 : i32
    return %arg0, %c0_i32, %c0_i32_0 : i32, i32, i32
  }
}

</mosaic_0001>

<llo_original>
// kernel: cross_attention_block.1
$region0: #{cross_attention_block.1}
  #allocation0 [shape = 'u32[]', space=smem, size = 0x4, offset = 0x4, fixed_abs, tag = 'smem constant byte address 0x4 - core index']
  #allocation1 [shape = 'u32[144,128]{1,0:T(1,128)}', space=vmem, size = 0x12000, scoped, tag = 'internal scratch']
  %s0 = inlined_call_operand.hbm [shape: f32[2,8,256], index: 0, kind: input, shape index: {}]
  %s1 = inlined_call_operand.hbm [shape: f32[2,8,256], index: 1, kind: input, shape index: {}]
  %s2 = inlined_call_operand.hbm [shape: f32[2,8,8], index: 2, kind: input, shape index: {}]
  %s3 = inlined_call_operand.hbm [shape: bf16[256,256], index: 3, kind: input, shape index: {}]
  %s4 = inlined_call_operand.hbm [shape: bf16[256,512], index: 4, kind: input, shape index: {}]
  %s5 = inlined_call_operand.hbm [shape: bf16[256,256], index: 5, kind: input, shape index: {}]
  %s6 = inlined_call_operand.hbm [shape: f32[2,8,256], index: 6, kind: output, shape index: {}]
  %s7 = sld [smem:[#allocation0]]
  $region81: #{cross_attention_block.1} parent=0
    _
  %s9 = ssub.s32 1, %s7
  %s10 = scalar_select 0, %s9, %s7
  $region1: #{cross_attention_block.1} parent=0
    #allocation2 [shape = 'u8[16384]{0}', space=vmem, size = 0x4000, scoped, tag = 'input window, operand 0']
    #allocation3 [shape = 's32[2]{0}', space=sflag, size = 0x8, scoped, tag = 'scoped memory for cross_attention_block.1']
    #allocation4 [shape = 's32[2]{0}', space=sflag, size = 0x8, scoped, tag = 'scoped memory for cross_attention_block.1']
    #allocation5 [shape = 'u8[16384]{0}', space=vmem, size = 0x4000, scoped, tag = 'input window, operand 1']
    #allocation6 [shape = 's32[2]{0}', space=sflag, size = 0x8, scoped, tag = 'scoped memory for cross_attention_block.1']
    #allocation7 [shape = 'u8[8192]{0}', space=vmem, size = 0x2000, scoped, tag = 'input window, operand 2']
    #allocation8 [shape = 'u8[131072]{0}', space=vmem, size = 0x20000, scoped, tag = 'input window, operand 3, single buffered']
    #allocation9 [shape = 's32[1]{0}', space=sflag, size = 0x4, scoped, tag = 'scoped memory for cross_attention_block.1']
    #allocation10 [shape = 'u8[262144]{0}', space=vmem, size = 0x40000, scoped, tag = 'input window, operand 4, single buffered']
    #allocation11 [shape = 'u8[131072]{0}', space=vmem, size = 0x20000, scoped, tag = 'input window, operand 5, single buffered']
    #allocation12 [shape = 's32[1]{0}', space=sflag, size = 0x4, scoped, tag = 'scoped memory for cross_attention_block.1']
    #allocation13 [shape = 'u8[16384]{0}', space=vmem, size = 0x4000, scoped, tag = 'output window, operand 0']
    %11 = vsyncpa [#allocation3], 0
    %s12 = scalar_lea.sflag [#allocation3], 1
    %13 = vsyncpa %s12, 0
    %14 = vsyncpa [#allocation6], 0
    %s15 = scalar_lea.sflag [#allocation6], 1
    %16 = vsyncpa %s15, 0
    %17 = vsyncpa [#allocation9], 0
    %18 = vsyncpa [#allocation12], 0
    %19 = vsyncpa [#allocation4], 0
    %s20 = scalar_lea.sflag [#allocation4], 1
    %21 = vsyncpa %s20, 0
    loop: start=0, step=1, limit=4
    $region2: #{cross_attention_block.1} parent=1 // loop_pre_header
      _
    $region3: #{cross_attention_block.1} parent=1 // loop_header
      %s23 = sphi 0, %s27
      %p24 = scmp.ge.s32.totalorder %s23, 4
      %s33 = sphi 0, %s35
      %s36 = sphi 0, %s33
      %s37 = sphi 0, %s36
      %s53 = sphi 0, %s37
      %s59 = sphi 0, %s61
      %s62 = sphi 0, %s59
      %s63 = sphi 0, %s62
      %s79 = sphi 0, %s63
      %s85 = sphi 0, %s87
      %s88 = sphi 0, %s85
      %s89 = sphi 0, %s88
      %s105 = sphi 0, %s89
      %s109 = sphi 0, %s109
      %s111 = sphi 0, %s109
      %s112 = sphi 0, %s111
      %s126 = sphi 0, %s112
      %s130 = sphi 0, %s130
      %s132 = sphi 0, %s130
      %s133 = sphi 0, %s132
      %s147 = sphi 0, %s133
      %s151 = sphi 0, %s151
      %s153 = sphi 0, %s151
      %s154 = sphi 0, %s153
      %s168 = sphi 0, %s154
      %s174 = sphi 0, %s176
      %s177 = sphi 0, %s174
      %s178 = sphi 0, %s177
      %s194 = sphi 0, %s178
    $region4: #{cross_attention_block.1} parent=1 // loop_header_branch
      %26 = sbr.rel (%p24) target = $region8
    $region5: #{cross_attention_block.1} parent=1 // loop_body
      %s28 = ssub.s32 %s23, 1
      %s29 = ssub.s32 %s23, 2
      %s30 = sadd.s32 %s23, 1
      %s31 = ssub.s32 %s23, %s30
      %p32 = scmp.eq.s32.totalorder %s31, 0
      %s34 = sadd.s32 %s33, 1
      %s35 = scalar_select %p32, %s33, %s34
      %p38 = pneg %p32
      %p39 = scmp.eq.s32.totalorder %s23, 1
      %p40 = por %p38, %p39
      %p41 = scmp.ne.s32.totalorder %s33, %s36
      %p42 = scmp.eq.s32.totalorder %s23, 0
      %p43 = por %p41, %p42
      %p44 = scmp.ne.s32.totalorder %s33, %s36
      %p45 = scmp.eq.s32.totalorder %s28, 1
      %p46 = por %p44, %p45
      %p47 = scmp.ne.s32.totalorder %s36, %s37
      %p48 = scmp.eq.s32.totalorder %s28, 0
      %p49 = por %p47, %p48
      %p50 = scmp.ne.s32.totalorder %s36, %s37
      %p51 = scmp.eq.s32.totalorder %s29, 1
      %p52 = por %p50, %p51
      %p54 = scmp.ne.s32.totalorder %s37, %s53
      %p55 = scmp.eq.s32.totalorder %s29, 0
      %p56 = por %p54, %p55
      %s57 = ssub.s32 %s23, %s30
      %p58 = scmp.eq.s32.totalorder %s57, 0
      %s60 = sadd.s32 %s59, 1
      %s61 = scalar_select %p58, %s59, %s60
      %p64 = pneg %p58
      %p65 = scmp.eq.s32.totalorder %s23, 1
      %p66 = por %p64, %p65
      %p67 = scmp.ne.s32.totalorder %s59, %s62
      %p68 = scmp.eq.s32.totalorder %s23, 0
      %p69 = por %p67, %p68
      %p70 = scmp.ne.s32.totalorder %s59, %s62
      %p71 = scmp.eq.s32.totalorder %s28, 1
      %p72 = por %p70, %p71
      %p73 = scmp.ne.s32.totalorder %s62, %s63
      %p74 = scmp.eq.s32.totalorder %s28, 0
      %p75 = por %p73, %p74
      %p76 = scmp.ne.s32.totalorder %s62, %s63
      %p77 = scmp.eq.s32.totalorder %s29, 1
      %p78 = por %p76, %p77
      %p80 = scmp.ne.s32.totalorder %s63, %s79
      %p81 = scmp.eq.s32.totalorder %s29, 0
      %p82 = por %p80, %p81
      %s83 = ssub.s32 %s23, %s30
      %p84 = scmp.eq.s32.totalorder %s83, 0
      %s86 = sadd.s32 %s85, 1
      %s87 = scalar_select %p84, %s85, %s86
      %p90 = pneg %p84
      %p91 = scmp.eq.s32.totalorder %s23, 1
      %p92 = por %p90, %p91
      %p93 = scmp.ne.s32.totalorder %s85, %s88
      %p94 = scmp.eq.s32.totalorder %s23, 0
      %p95 = por %p93, %p94
      %p96 = scmp.ne.s32.totalorder %s85, %s88
      %p97 = scmp.eq.s32.totalorder %s28, 1
      %p98 = por %p96, %p97
      %p99 = scmp.ne.s32.totalorder %s88, %s89
      %p100 = scmp.eq.s32.totalorder %s28, 0
      %p101 = por %p99, %p100
      %p102 = scmp.ne.s32.totalorder %s88, %s89
      %p103 = scmp.eq.s32.totalorder %s29, 1
      %p104 = por %p102, %p103
      %p106 = scmp.ne.s32.totalorder %s89, %s105
      %p107 = scmp.eq.s32.totalorder %s29, 0
      %p108 = por %p106, %p107
      %s110 = sadd.s32 %s109, 1
      %p113 = scmp.eq.s32.totalorder %s23, 1
      %p114 = scmp.ne.s32.totalorder %s109, %s111
      %p115 = scmp.eq.s32.totalorder %s23, 0
      %p116 = por %p114, %p115
      %p117 = scmp.ne.s32.totalorder %s109, %s111
      %p118 = scmp.eq.s32.totalorder %s28, 1
      %p119 = por %p117, %p118
      %p120 = scmp.ne.s32.totalorder %s111, %s112
      %p121 = scmp.eq.s32.totalorder %s28, 0
      %p122 = por %p120, %p121
      %p123 = scmp.ne.s32.totalorder %s111, %s112
      %p124 = scmp.eq.s32.totalorder %s29, 1
      %p125 = por %p123, %p124
      %p127 = scmp.ne.s32.totalorder %s112, %s126
      %p128 = scmp.eq.s32.totalorder %s29, 0
      %p129 = por %p127, %p128
      %s131 = sadd.s32 %s130, 1
      %p134 = scmp.eq.s32.totalorder %s23, 1
      %p135 = scmp.ne.s32.totalorder %s130, %s132
      %p136 = scmp.eq.s32.totalorder %s23, 0
      %p137 = por %p135, %p136
      %p138 = scmp.ne.s32.totalorder %s130, %s132
      %p139 = scmp.eq.s32.totalorder %s28, 1
      %p140 = por %p138, %p139
      %p141 = scmp.ne.s32.totalorder %s132, %s133
      %p142 = scmp.eq.s32.totalorder %s28, 0
      %p143 = por %p141, %p142
      %p144 = scmp.ne.s32.totalorder %s132, %s133
      %p145 = scmp.eq.s32.totalorder %s29, 1
      %p146 = por %p144, %p145
      %p148 = scmp.ne.s32.totalorder %s133, %s147
      %p149 = scmp.eq.s32.totalorder %s29, 0
      %p150 = por %p148, %p149
      %s152 = sadd.s32 %s151, 1
      %p155 = scmp.eq.s32.totalorder %s23, 1
      %p156 = scmp.ne.s32.totalorder %s151, %s153
      %p157 = scmp.eq.s32.totalorder %s23, 0
      %p158 = por %p156, %p157
      %p159 = scmp.ne.s32.totalorder %s151, %s153
      %p160 = scmp.eq.s32.totalorder %s28, 1
      %p161 = por %p159, %p160
      %p162 = scmp.ne.s32.totalorder %s153, %s154
      %p163 = scmp.eq.s32.totalorder %s28, 0
      %p164 = por %p162, %p163
      %p165 = scmp.ne.s32.totalorder %s153, %s154
      %p166 = scmp.eq.s32.totalorder %s29, 1
      %p167 = por %p165, %p166
      %p169 = scmp.ne.s32.totalorder %s154, %s168
      %p170 = scmp.eq.s32.totalorder %s29, 0
      %p171 = por %p169, %p170
      %s172 = ssub.s32 %s23, %s30
      %p173 = scmp.eq.s32.totalorder %s172, 0
      %s175 = sadd.s32 %s174, 1
      %s176 = scalar_select %p173, %s174, %s175
      %p179 = pneg %p173
      %p180 = scmp.eq.s32.totalorder %s23, 1
      %p181 = por %p179, %p180
      %p182 = scmp.ne.s32.totalorder %s174, %s177
      %p183 = scmp.eq.s32.totalorder %s23, 0
      %p184 = por %p182, %p183
      %p185 = scmp.ne.s32.totalorder %s174, %s177
      %p186 = scmp.eq.s32.totalorder %s28, 1
      %p187 = por %p185, %p186
      %p188 = scmp.ne.s32.totalorder %s177, %s178
      %p189 = scmp.eq.s32.totalorder %s28, 0
      %p190 = por %p188, %p189
      %p191 = scmp.ne.s32.totalorder %s177, %s178
      %p192 = scmp.eq.s32.totalorder %s29, 1
      %p193 = por %p191, %p192
      %p195 = scmp.ne.s32.totalorder %s178, %s194
      %p196 = scmp.eq.s32.totalorder %s29, 0
      %p197 = por %p195, %p196
      %p198 = scmp.le.s32.totalorder 1, %s23
      %p199 = scmp.lt.s32.totalorder %s23, 3
      %p200 = pnand %p198, %p199
      %p201 = pneg %p200
      // Predicated region
      $region9: #{cross_attention_block.1} parent=5 // pred_check
        _
      $region10: #{cross_attention_block.1} parent=5 // pred_check_branch
        %203 = sbr.rel (%p200) target = $region12
      $region11: #{cross_attention_block.1} parent=5 // pred_region
        %s204 = ssub.s32 %s23, 1
        // Predicated region
        $region13: #{cross_attention_block.1} parent=11 // pred_check
          %p205 = pneg %p122
        $region14: #{cross_attention_block.1} parent=11 // pred_check_branch
          %207 = sbr.rel (%p205) target = $region16
        $region15: #{cross_attention_block.1} parent=11 // pred_region
          %s209 = ssub.s32 4096, 4096
          %210 = vsyncadd [#allocation9], %s209
          %s211 = sshll.u32 [#allocation8], 4
          %s212 = int_to_ptr.vmem [resolvable:$true] %s211
          %217 = dma.hbm_to_vmem [thread:$0]  %s3, 4096, %s212, [#allocation9], 128, 128, 8
        $region16: #{cross_attention_block.1} parent=11 // pred_fallthru
          _
        // Predicated region
        $region17: #{cross_attention_block.1} parent=11 // pred_check
          %p218 = pneg %p143
        $region18: #{cross_attention_block.1} parent=11 // pred_check_branch
          %220 = sbr.rel (%p218) target = $region20
        $region19: #{cross_attention_block.1} parent=11 // pred_region
          %s222 = ssub.s32 8192, 8192
          %223 = vsyncadd [#allocation9], %s222
          %s224 = sshll.u32 [#allocation10], 4
          %s225 = int_to_ptr.vmem [resolvable:$true] %s224
          %230 = dma.hbm_to_vmem [thread:$0]  %s4, 8192, %s225, [#allocation9], 256, 256, 16
        $region20: #{cross_attention_block.1} parent=11 // pred_fallthru
          _
        // Predicated region
        $region21: #{cross_attention_block.1} parent=11 // pred_check
          %p231 = pneg %p164
        $region22: #{cross_attention_block.1} parent=11 // pred_check_branch
          %233 = sbr.rel (%p231) target = $region24
        $region23: #{cross_attention_block.1} parent=11 // pred_region
          %s235 = ssub.s32 4096, 4096
          %236 = vsyncadd [#allocation12], %s235
          %s237 = sshll.u32 [#allocation11], 4
          %s238 = int_to_ptr.vmem [resolvable:$true] %s237
          %243 = dma.hbm_to_vmem [thread:$0]  %s5, 4096, %s238, [#allocation12], 128, 128, 8
        $region24: #{cross_attention_block.1} parent=11 // pred_fallthru
          _
      $region12: #{cross_attention_block.1} parent=5 // pred_fallthru
        _
      %p244 = scmp.lt.s32.totalorder %s23, 2
      // Predicated region
      $region25: #{cross_attention_block.1} parent=5 // pred_check
        %p245 = pneg %p244
      $region26: #{cross_attention_block.1} parent=5 // pred_check_branch
        %247 = sbr.rel (%p245) target = $region28
      $region27: #{cross_attention_block.1} parent=5 // pred_region
        // Predicated region
        $region29: #{cross_attention_block.1} parent=27 // pred_check
          %p248 = pneg %p43
        $region30: #{cross_attention_block.1} parent=27 // pred_check_branch
          %250 = sbr.rel (%p248) target = $region32
        $region31: #{cross_attention_block.1} parent=27 // pred_region
          %s251 = sand.u32 %s33, 1
          %s252 = scalar_lea.sflag [#allocation3], %s251
          %s253 = sand.u32 %s33, 1
          %s254 = smul.addr %s253, 16
          %s255 = scalar_lea.vmem [#allocation2], %s254
          %s257 = ssub.s32 256, 256
          %258 = vsyncadd %s252, %s257
          %s259 = smul.addr %s23, 2
          %s260 = smul.addr %s259, 128
          %s261 = scalar_lea.hbm %s0, %s260
          %s263 = sshll.u32 %s255, 4
          %s264 = int_to_ptr.vmem [resolvable:$true] %s263
          %266 = dma.hbm_to_vmem [thread:$0]  %s261, 256, %s264, %s252
        $region32: #{cross_attention_block.1} parent=27 // pred_fallthru
          _
        // Predicated region
        $region33: #{cross_attention_block.1} parent=27 // pred_check
          %p267 = pneg %p69
        $region34: #{cross_attention_block.1} parent=27 // pred_check_branch
          %269 = sbr.rel (%p267) target = $region36
        $region35: #{cross_attention_block.1} parent=27 // pred_region
          %s270 = sand.u32 %s23, 1
          %s271 = scalar_lea.sflag [#allocation6], %s270
          %s272 = sand.u32 %s59, 1
          %s273 = smul.addr %s272, 16
          %s274 = scalar_lea.vmem [#allocation5], %s273
          %s276 = ssub.s32 256, 256
          %277 = vsyncadd %s271, %s276
          %s278 = smul.addr %s23, 2
          %s279 = smul.addr %s278, 128
          %s280 = scalar_lea.hbm %s1, %s279
          %s282 = sshll.u32 %s274, 4
          %s283 = int_to_ptr.vmem [resolvable:$true] %s282
          %285 = dma.hbm_to_vmem [thread:$0]  %s280, 256, %s283, %s271
        $region36: #{cross_attention_block.1} parent=27 // pred_fallthru
          _
        // Predicated region
        $region37: #{cross_attention_block.1} parent=27 // pred_check
          %p286 = pneg %p95
        $region38: #{cross_attention_block.1} parent=27 // pred_check_branch
          %288 = sbr.rel (%p286) target = $region40
        $region39: #{cross_attention_block.1} parent=27 // pred_region
          %s289 = sand.u32 %s23, 1
          %s290 = scalar_lea.sflag [#allocation6], %s289
          %s291 = sand.u32 %s85, 1
          %s292 = smul.addr %s291, 8
          %s293 = scalar_lea.vmem [#allocation7], %s292
          %s295 = ssub.s32 128, 128
          %296 = vsyncadd %s290, %s295
          %s297 = smul.addr %s23, 128
          %s298 = scalar_lea.hbm %s2, %s297
          %s300 = sshll.u32 %s293, 4
          %s301 = int_to_ptr.vmem [resolvable:$true] %s300
          %303 = dma.hbm_to_vmem [thread:$0]  %s298, 128, %s301, %s290
        $region40: #{cross_attention_block.1} parent=27 // pred_fallthru
          _
      $region28: #{cross_attention_block.1} parent=5 // pred_fallthru
        _
      %p304 = scmp.le.s32.totalorder 1, %s23
      %p305 = scmp.lt.s32.totalorder %s23, 3
      %p306 = pnand %p304, %p305
      %p307 = pneg %p306
      // Predicated region
      $region41: #{cross_attention_block.1} parent=5 // pred_check
        _
      $region42: #{cross_attention_block.1} parent=5 // pred_check_branch
        %309 = sbr.rel (%p306) target = $region44
      $region43: #{cross_attention_block.1} parent=5 // pred_region
        %s310 = ssub.s32 %s23, 1
        %s311 = sand.u32 %s36, 1
        %s312 = scalar_lea.sflag [#allocation3], %s311
        %s313 = sand.u32 %s36, 1
        %s314 = smul.addr %s313, 16
        %s315 = scalar_lea.vmem [#allocation2], %s314
        // Predicated region
        $region45: #{cross_attention_block.1} parent=43 // pred_check
          %p316 = pneg %p49
        $region46: #{cross_attention_block.1} parent=43 // pred_check_branch
          %318 = sbr.rel (%p316) target = $region48
        $region47: #{cross_attention_block.1} parent=43 // pred_region
          %319 = dma.done %s312, 256
        $region48: #{cross_attention_block.1} parent=43 // pred_fallthru
          _
        %s320 = sand.u32 %s28, 1
        %s321 = scalar_lea.sflag [#allocation6], %s320
        %s322 = sand.u32 %s62, 1
        %s323 = smul.addr %s322, 16
        %s324 = scalar_lea.vmem [#allocation5], %s323
        // Predicated region
        $region49: #{cross_attention_block.1} parent=43 // pred_check
          %p325 = pneg %p75
        $region50: #{cross_attention_block.1} parent=43 // pred_check_branch
          %327 = sbr.rel (%p325) target = $region52
        $region51: #{cross_attention_block.1} parent=43 // pred_region
          %328 = dma.done %s321, 256
        $region52: #{cross_attention_block.1} parent=43 // pred_fallthru
          _
        %s329 = sand.u32 %s28, 1
        %s330 = scalar_lea.sflag [#allocation6], %s329
        %s331 = sand.u32 %s88, 1
        %s332 = smul.addr %s331, 8
        %s333 = scalar_lea.vmem [#allocation7], %s332
        // Predicated region
        $region53: #{cross_attention_block.1} parent=43 // pred_check
          %p334 = pneg %p101
        $region54: #{cross_attention_block.1} parent=43 // pred_check_branch
          %336 = sbr.rel (%p334) target = $region56
        $region55: #{cross_attention_block.1} parent=43 // pred_region
          %337 = dma.done %s330, 128
        $region56: #{cross_attention_block.1} parent=43 // pred_fallthru
          _
        // Predicated region
        $region57: #{cross_attention_block.1} parent=43 // pred_check
          %p338 = pneg %p122
        $region58: #{cross_attention_block.1} parent=43 // pred_check_branch
          %340 = sbr.rel (%p338) target = $region60
        $region59: #{cross_attention_block.1} parent=43 // pred_region
          %341 = dma.done [#allocation9], 4096
        $region60: #{cross_attention_block.1} parent=43 // pred_fallthru
          _
        // Predicated region
        $region61: #{cross_attention_block.1} parent=43 // pred_check
          %p342 = pneg %p143
        $region62: #{cross_attention_block.1} parent=43 // pred_check_branch
          %344 = sbr.rel (%p342) target = $region64
        $region63: #{cross_attention_block.1} parent=43 // pred_region
          %345 = dma.done [#allocation9], 8192
        $region64: #{cross_attention_block.1} parent=43 // pred_fallthru
          _
        // Predicated region
        $region65: #{cross_attention_block.1} parent=43 // pred_check
          %p346 = pneg %p164
        $region66: #{cross_attention_block.1} parent=43 // pred_check_branch
          %348 = sbr.rel (%p346) target = $region68
        $region67: #{cross_attention_block.1} parent=43 // pred_region
          %349 = dma.done [#allocation12], 4096
        $region68: #{cross_attention_block.1} parent=43 // pred_fallthru
          _
        %s350 = sand.u32 %s36, 1
        %s351 = scalar_lea.sflag [#allocation3], %s350
        %s352 = sand.u32 %s36, 1
        %s353 = smul.addr %s352, 16
        %s354 = scalar_lea.vmem [#allocation2], %s353
        %p355 = pneg %p49
        %p356 = pneg %p46
        %s357 = sand.u32 %s28, 1
        %s358 = scalar_lea.sflag [#allocation6], %s357
        %s359 = sand.u32 %s62, 1
        %s360 = smul.addr %s359, 16
        %s361 = scalar_lea.vmem [#allocation5], %s360
        %p362 = pneg %p75
        %p363 = pneg %p72
        %s364 = sand.u32 %s28, 1
        %s365 = scalar_lea.sflag [#allocation6], %s364
        %s366 = sand.u32 %s88, 1
        %s367 = smul.addr %s366, 8
        %s368 = scalar_lea.vmem [#allocation7], %s367
        %p369 = pneg %p101
        %p370 = pneg %p98
        %p371 = pneg %p122
        %p372 = pneg %p119
        %p373 = pneg %p143
        %p374 = pneg %p140
        %p375 = pneg %p164
        %p376 = pneg %p161
        %p377 = pneg %p190
        %p378 = pneg %p187
        %s379 = sand.u32 %s177, 1
        %s380 = scalar_lea.sflag [#allocation4], %s379
        %s381 = sand.u32 %s177, 1
        %s382 = smul.addr %s381, 16
        %s383 = scalar_lea.vmem [#allocation13], %s382
        %v385 = vld [vmem:[%s315] sm:$0xff]
        %v386 = vld [vmem:[%s315 + $0x8] sm:$0xff]
        %v387 = vpack.c.bf16 %v385, %v385
        %v388 = vpack.c.bf16 %v386, %v386
        %v389 = vld [vmem:[%s324] sm:$0xff]
        %v390 = vld [vmem:[%s324 + $0x8] sm:$0xff]
        %v391 = vpack.c.bf16 %v389, %v389
        %v392 = vpack.c.bf16 %v390, %v390
        %v393 = vld [vmem:[#allocation8] sm:$0xff]
        %v394 = vld [vmem:[#allocation8 + $0x8] sm:$0xff]
        %v395 = vld [vmem:[#allocation8 + $0x10] sm:$0xff]
        %v396 = vld [vmem:[#allocation8 + $0x18] sm:$0xff]
        %v397 = vld [vmem:[#allocation8 + $0x20] sm:$0xff]
        %v398 = vld [vmem:[#allocation8 + $0x28] sm:$0xff]
        %v399 = vld [vmem:[#allocation8 + $0x30] sm:$0xff]
        %v400 = vld [vmem:[#allocation8 + $0x38] sm:$0xff]
        %v401 = vld [vmem:[#allocation8 + $0x40] sm:$0xff]
        %v402 = vld [vmem:[#allocation8 + $0x48] sm:$0xff]
        %v403 = vld [vmem:[#allocation8 + $0x50] sm:$0xff]
        %v404 = vld [vmem:[#allocation8 + $0x58] sm:$0xff]
        %v405 = vld [vmem:[#allocation8 + $0x60] sm:$0xff]
        %v406 = vld [vmem:[#allocation8 + $0x68] sm:$0xff]
        %v407 = vld [vmem:[#allocation8 + $0x70] sm:$0xff]
        %v408 = vld [vmem:[#allocation8 + $0x78] sm:$0xff]
        %v409 = vld [vmem:[#allocation8 + $0x80] sm:$0xff]
        %v410 = vld [vmem:[#allocation8 + $0x88] sm:$0xff]
        %v411 = vld [vmem:[#allocation8 + $0x90] sm:$0xff]
        %v412 = vld [vmem:[#allocation8 + $0x98] sm:$0xff]
        %v413 = vld [vmem:[#allocation8 + $0xa0] sm:$0xff]
        %v414 = vld [vmem:[#allocation8 + $0xa8] sm:$0xff]
        %v415 = vld [vmem:[#allocation8 + $0xb0] sm:$0xff]
        %v416 = vld [vmem:[#allocation8 + $0xb8] sm:$0xff]
        %v417 = vld [vmem:[#allocation8 + $0xc0] sm:$0xff]
        %v418 = vld [vmem:[#allocation8 + $0xc8] sm:$0xff]
        %v419 = vld [vmem:[#allocation8 + $0xd0] sm:$0xff]
        %v420 = vld [vmem:[#allocation8 + $0xd8] sm:$0xff]
        %v421 = vld [vmem:[#allocation8 + $0xe0] sm:$0xff]
        %v422 = vld [vmem:[#allocation8 + $0xe8] sm:$0xff]
        %v423 = vld [vmem:[#allocation8 + $0xf0] sm:$0xff]
        %v424 = vld [vmem:[#allocation8 + $0xf8] sm:$0xff]
        %v457 = vunpack.c.l.b16 %v393
        %v458 = vunpack.c.h.b16 %v393
        %v459 = vunpack.c.l.b16 %v394
        %v460 = vunpack.c.h.b16 %v394
        %v461 = vunpack.c.l.b16 %v395
        %v462 = vunpack.c.h.b16 %v395
        %v463 = vunpack.c.l.b16 %v396
        %v464 = vunpack.c.h.b16 %v396
        %v465 = vunpack.c.l.b16 %v397
        %v466 = vunpack.c.h.b16 %v397
        %v467 = vunpack.c.l.b16 %v398
        %v468 = vunpack.c.h.b16 %v398
        %v469 = vunpack.c.l.b16 %v399
        %v470 = vunpack.c.h.b16 %v399
        %v471 = vunpack.c.l.b16 %v400
        %v472 = vunpack.c.h.b16 %v400
        %v473 = vunpack.c.l.b16 %v401
        %v474 = vunpack.c.h.b16 %v401
        %v475 = vunpack.c.l.b16 %v402
        %v476 = vunpack.c.h.b16 %v402
        %v477 = vunpack.c.l.b16 %v403
        %v478 = vunpack.c.h.b16 %v403
        %v479 = vunpack.c.l.b16 %v404
        %v480 = vunpack.c.h.b16 %v404
        %v481 = vunpack.c.l.b16 %v405
        %v482 = vunpack.c.h.b16 %v405
        %v483 = vunpack.c.l.b16 %v406
        %v484 = vunpack.c.h.b16 %v406
        %v485 = vunpack.c.l.b16 %v407
        %v486 = vunpack.c.h.b16 %v407
        %v487 = vunpack.c.l.b16 %v408
        %v488 = vunpack.c.h.b16 %v408
        %v489 = vunpack.c.l.b16 %v409
        %v490 = vunpack.c.h.b16 %v409
        %v491 = vunpack.c.l.b16 %v410
        %v492 = vunpack.c.h.b16 %v410
        %v493 = vunpack.c.l.b16 %v411
        %v494 = vunpack.c.h.b16 %v411
        %v495 = vunpack.c.l.b16 %v412
        %v496 = vunpack.c.h.b16 %v412
        %v497 = vunpack.c.l.b16 %v413
        %v498 = vunpack.c.h.b16 %v413
        %v499 = vunpack.c.l.b16 %v414
        %v500 = vunpack.c.h.b16 %v414
        %v501 = vunpack.c.l.b16 %v415
        %v502 = vunpack.c.h.b16 %v415
        %v503 = vunpack.c.l.b16 %v416
        %v504 = vunpack.c.h.b16 %v416
        %v505 = vunpack.c.l.b16 %v417
        %v506 = vunpack.c.h.b16 %v417
        %v507 = vunpack.c.l.b16 %v418
        %v508 = vunpack.c.h.b16 %v418
        %v509 = vunpack.c.l.b16 %v419
        %v510 = vunpack.c.h.b16 %v419
        %v511 = vunpack.c.l.b16 %v420
        %v512 = vunpack.c.h.b16 %v420
        %v513 = vunpack.c.l.b16 %v421
        %v514 = vunpack.c.h.b16 %v421
        %v515 = vunpack.c.l.b16 %v422
        %v516 = vunpack.c.h.b16 %v422
        %v517 = vunpack.c.l.b16 %v423
        %v518 = vunpack.c.h.b16 %v423
        %v519 = vunpack.c.l.b16 %v424
        %v520 = vunpack.c.h.b16 %v424
        %v521 = vpack.c.b16 %v459, %v457
        %v522 = vpack.c.b16 %v460, %v458
        %v523 = vpack.c.b16 %v463, %v461
        %v524 = vpack.c.b16 %v464, %v462
        %v525 = vpack.c.b16 %v467, %v465
        %v526 = vpack.c.b16 %v468, %v466
        %v527 = vpack.c.b16 %v471, %v469
        %v528 = vpack.c.b16 %v472, %v470
        %v529 = vpack.c.b16 %v475, %v473
        %v530 = vpack.c.b16 %v476, %v474
        %v531 = vpack.c.b16 %v479, %v477
        %v532 = vpack.c.b16 %v480, %v478
        %v533 = vpack.c.b16 %v483, %v481
        %v534 = vpack.c.b16 %v484, %v482
        %v535 = vpack.c.b16 %v487, %v485
        %v536 = vpack.c.b16 %v488, %v486
        %v537 = vpack.c.b16 %v491, %v489
        %v538 = vpack.c.b16 %v492, %v490
        %v539 = vpack.c.b16 %v495, %v493
        %v540 = vpack.c.b16 %v496, %v494
        %v541 = vpack.c.b16 %v499, %v497
        %v542 = vpack.c.b16 %v500, %v498
        %v543 = vpack.c.b16 %v503, %v501
        %v544 = vpack.c.b16 %v504, %v502
        %v545 = vpack.c.b16 %v507, %v505
        %v546 = vpack.c.b16 %v508, %v506
        %v547 = vpack.c.b16 %v511, %v509
        %v548 = vpack.c.b16 %v512, %v510
        %v549 = vpack.c.b16 %v515, %v513
        %v550 = vpack.c.b16 %v516, %v514
        %v551 = vpack.c.b16 %v519, %v517
        %v552 = vpack.c.b16 %v520, %v518
        %585 = vmatprep.subr.bf16.mxu0 %v536
        %586 = vmatpush1.bf16.msra.mxu0 %v535
        %587 = vmatprep.subr.bf16.mxu0 %v534
        %588 = vmatpush1.bf16.msra.mxu0 %v533
        %589 = vmatprep.subr.bf16.mxu0 %v532
        %590 = vmatpush1.bf16.msra.mxu0 %v531
        %591 = vmatprep.subr.bf16.mxu0 %v530
        %592 = vmatpush1.bf16.msra.mxu0 %v529
        %593 = vmatprep.subr.bf16.mxu0 %v528
        %594 = vmatpush1.bf16.msra.mxu0 %v527
        %595 = vmatprep.subr.bf16.mxu0 %v526
        %596 = vmatpush1.bf16.msra.mxu0 %v525
        %597 = vmatprep.subr.bf16.mxu0 %v524
        %598 = vmatpush1.bf16.msra.mxu0 %v523
        %599 = vmatprep.subr.bf16.mxu0 %v522
        %600 = vmatpush1.bf16.msra.mxu0 %v521
        %601 = vmatprep.subr.bf16.mxu0 %v552
        %602 = vmatpush2.bf16.msra.mxu0 %v551
        %603 = vmatprep.subr.bf16.mxu0 %v550
        %604 = vmatpush2.bf16.msra.mxu0 %v549
        %605 = vmatprep.subr.bf16.mxu0 %v548
        %606 = vmatpush2.bf16.msra.mxu0 %v547
        %607 = vmatprep.subr.bf16.mxu0 %v546
        %608 = vmatpush2.bf16.msra.mxu0 %v545
        %609 = vmatprep.subr.bf16.mxu0 %v544
        %610 = vmatpush2.bf16.msra.mxu0 %v543
        %611 = vmatprep.subr.bf16.mxu0 %v542
        %612 = vmatpush2.bf16.msra.mxu0 %v541
        %613 = vmatprep.subr.bf16.mxu0 %v540
        %614 = vmatpush2.bf16.msra.mxu0 %v539
        %615 = vmatprep.subr.bf16.mxu0 %v538
        %616 = vmatpush2.bf16.msra.mxu0 %v537
        %617 = vmatprep.mubr.bf16.mxu0 %v388
        %618 = vmatmul.mubr.bf16.gmra.mxu0 %v387
        %v619 = vpop.f32.mrf.mxu0
        %v620 = vadd.f32 0.0, %v619
        %v621 = vpop.f32.mrf.mxu0
        %v622 = vadd.f32 0.0, %v621
        %v623 = vpop.f32.mrf.mxu0
        %v624 = vpop.f32.mrf.mxu0
        %625 = vdwg.mxu0
        %v626 = vld [vmem:[#allocation10] sm:$0xff]
        %v627 = vld [vmem:[#allocation10 + $0x8] sm:$0xff]
        %v628 = vld [vmem:[#allocation10 + $0x10] sm:$0xff]
        %v629 = vld [vmem:[#allocation10 + $0x18] sm:$0xff]
        %v630 = vld [vmem:[#allocation10 + $0x20] sm:$0xff]
        %v631 = vld [vmem:[#allocation10 + $0x28] sm:$0xff]
        %v632 = vld [vmem:[#allocation10 + $0x30] sm:$0xff]
        %v633 = vld [vmem:[#allocation10 + $0x38] sm:$0xff]
        %v634 = vld [vmem:[#allocation10 + $0x40] sm:$0xff]
        %v635 = vld [vmem:[#allocation10 + $0x48] sm:$0xff]
        %v636 = vld [vmem:[#allocation10 + $0x50] sm:$0xff]
        %v637 = vld [vmem:[#allocation10 + $0x58] sm:$0xff]
        %v638 = vld [vmem:[#allocation10 + $0x60] sm:$0xff]
        %v639 = vld [vmem:[#allocation10 + $0x68] sm:$0xff]
        %v640 = vld [vmem:[#allocation10 + $0x70] sm:$0xff]
        %v641 = vld [vmem:[#allocation10 + $0x78] sm:$0xff]
        %v642 = vld [vmem:[#allocation10 + $0x80] sm:$0xff]
        %v643 = vld [vmem:[#allocation10 + $0x88] sm:$0xff]
        %v644 = vld [vmem:[#allocation10 + $0x90] sm:$0xff]
        %v645 = vld [vmem:[#allocation10 + $0x98] sm:$0xff]
        %v646 = vld [vmem:[#allocation10 + $0xa0] sm:$0xff]
        %v647 = vld [vmem:[#allocation10 + $0xa8] sm:$0xff]
        %v648 = vld [vmem:[#allocation10 + $0xb0] sm:$0xff]
        %v649 = vld [vmem:[#allocation10 + $0xb8] sm:$0xff]
        %v650 = vld [vmem:[#allocation10 + $0xc0] sm:$0xff]
        %v651 = vld [vmem:[#allocation10 + $0xc8] sm:$0xff]
        %v652 = vld [vmem:[#allocation10 + $0xd0] sm:$0xff]
        %v653 = vld [vmem:[#allocation10 + $0xd8] sm:$0xff]
        %v654 = vld [vmem:[#allocation10 + $0xe0] sm:$0xff]
        %v655 = vld [vmem:[#allocation10 + $0xe8] sm:$0xff]
        %v656 = vld [vmem:[#allocation10 + $0xf0] sm:$0xff]
        %v657 = vld [vmem:[#allocation10 + $0xf8] sm:$0xff]
        %v658 = vld [vmem:[#allocation10 + $0x100] sm:$0xff]
        %v659 = vld [vmem:[#allocation10 + $0x108] sm:$0xff]
        %v660 = vld [vmem:[#allocation10 + $0x110] sm:$0xff]
        %v661 = vld [vmem:[#allocation10 + $0x118] sm:$0xff]
        %v662 = vld [vmem:[#allocation10 + $0x120] sm:$0xff]
        %v663 = vld [vmem:[#allocation10 + $0x128] sm:$0xff]
        %v664 = vld [vmem:[#allocation10 + $0x130] sm:$0xff]
        %v665 = vld [vmem:[#allocation10 + $0x138] sm:$0xff]
        %v666 = vld [vmem:[#allocation10 + $0x140] sm:$0xff]
        %v667 = vld [vmem:[#allocation10 + $0x148] sm:$0xff]
        %v668 = vld [vmem:[#allocation10 + $0x150] sm:$0xff]
        %v669 = vld [vmem:[#allocation10 + $0x158] sm:$0xff]
        %v670 = vld [vmem:[#allocation10 + $0x160] sm:$0xff]
        %v671 = vld [vmem:[#allocation10 + $0x168] sm:$0xff]
        %v672 = vld [vmem:[#allocation10 + $0x170] sm:$0xff]
        %v673 = vld [vmem:[#allocation10 + $0x178] sm:$0xff]
        %v674 = vld [vmem:[#allocation10 + $0x180] sm:$0xff]
        %v675 = vld [vmem:[#allocation10 + $0x188] sm:$0xff]
        %v676 = vld [vmem:[#allocation10 + $0x190] sm:$0xff]
        %v677 = vld [vmem:[#allocation10 + $0x198] sm:$0xff]
        %v678 = vld [vmem:[#allocation10 + $0x1a0] sm:$0xff]
        %v679 = vld [vmem:[#allocation10 + $0x1a8] sm:$0xff]
        %v680 = vld [vmem:[#allocation10 + $0x1b0] sm:$0xff]
        %v681 = vld [vmem:[#allocation10 + $0x1b8] sm:$0xff]
        %v682 = vld [vmem:[#allocation10 + $0x1c0] sm:$0xff]
        %v683 = vld [vmem:[#allocation10 + $0x1c8] sm:$0xff]
        %v684 = vld [vmem:[#allocation10 + $0x1d0] sm:$0xff]
        %v685 = vld [vmem:[#allocation10 + $0x1d8] sm:$0xff]
        %v686 = vld [vmem:[#allocation10 + $0x1e0] sm:$0xff]
        %v687 = vld [vmem:[#allocation10 + $0x1e8] sm:$0xff]
        %v688 = vld [vmem:[#allocation10 + $0x1f0] sm:$0xff]
        %v689 = vld [vmem:[#allocation10 + $0x1f8] sm:$0xff]
        %v754 = vunpack.c.l.b16 %v626
        %v755 = vunpack.c.h.b16 %v626
        %v756 = vunpack.c.l.b16 %v627
        %v757 = vunpack.c.h.b16 %v627
        %v758 = vunpack.c.l.b16 %v628
        %v759 = vunpack.c.h.b16 %v628
        %v760 = vunpack.c.l.b16 %v629
        %v761 = vunpack.c.h.b16 %v629
        %v762 = vunpack.c.l.b16 %v630
        %v763 = vunpack.c.h.b16 %v630
        %v764 = vunpack.c.l.b16 %v631
        %v765 = vunpack.c.h.b16 %v631
        %v766 = vunpack.c.l.b16 %v632
        %v767 = vunpack.c.h.b16 %v632
        %v768 = vunpack.c.l.b16 %v633
        %v769 = vunpack.c.h.b16 %v633
        %v770 = vunpack.c.l.b16 %v634
        %v771 = vunpack.c.h.b16 %v634
        %v772 = vunpack.c.l.b16 %v635
        %v773 = vunpack.c.h.b16 %v635
        %v774 = vunpack.c.l.b16 %v636
        %v775 = vunpack.c.h.b16 %v636
        %v776 = vunpack.c.l.b16 %v637
        %v777 = vunpack.c.h.b16 %v637
        %v778 = vunpack.c.l.b16 %v638
        %v779 = vunpack.c.h.b16 %v638
        %v780 = vunpack.c.l.b16 %v639
        %v781 = vunpack.c.h.b16 %v639
        %v782 = vunpack.c.l.b16 %v640
        %v783 = vunpack.c.h.b16 %v640
        %v784 = vunpack.c.l.b16 %v641
        %v785 = vunpack.c.h.b16 %v641
        %v786 = vunpack.c.l.b16 %v642
        %v787 = vunpack.c.h.b16 %v642
        %v788 = vunpack.c.l.b16 %v643
        %v789 = vunpack.c.h.b16 %v643
        %v790 = vunpack.c.l.b16 %v644
        %v791 = vunpack.c.h.b16 %v644
        %v792 = vunpack.c.l.b16 %v645
        %v793 = vunpack.c.h.b16 %v645
        %v794 = vunpack.c.l.b16 %v646
        %v795 = vunpack.c.h.b16 %v646
        %v796 = vunpack.c.l.b16 %v647
        %v797 = vunpack.c.h.b16 %v647
        %v798 = vunpack.c.l.b16 %v648
        %v799 = vunpack.c.h.b16 %v648
        %v800 = vunpack.c.l.b16 %v649
        %v801 = vunpack.c.h.b16 %v649
        %v802 = vunpack.c.l.b16 %v650
        %v803 = vunpack.c.h.b16 %v650
        %v804 = vunpack.c.l.b16 %v651
        %v805 = vunpack.c.h.b16 %v651
        %v806 = vunpack.c.l.b16 %v652
        %v807 = vunpack.c.h.b16 %v652
        %v808 = vunpack.c.l.b16 %v653
        %v809 = vunpack.c.h.b16 %v653
        %v810 = vunpack.c.l.b16 %v654
        %v811 = vunpack.c.h.b16 %v654
        %v812 = vunpack.c.l.b16 %v655
        %v813 = vunpack.c.h.b16 %v655
        %v814 = vunpack.c.l.b16 %v656
        %v815 = vunpack.c.h.b16 %v656
        %v816 = vunpack.c.l.b16 %v657
        %v817 = vunpack.c.h.b16 %v657
        %v818 = vunpack.c.l.b16 %v658
        %v819 = vunpack.c.h.b16 %v658
        %v820 = vunpack.c.l.b16 %v659
        %v821 = vunpack.c.h.b16 %v659
        %v822 = vunpack.c.l.b16 %v660
        %v823 = vunpack.c.h.b16 %v660
        %v824 = vunpack.c.l.b16 %v661
        %v825 = vunpack.c.h.b16 %v661
        %v826 = vunpack.c.l.b16 %v662
        %v827 = vunpack.c.h.b16 %v662
        %v828 = vunpack.c.l.b16 %v663
        %v829 = vunpack.c.h.b16 %v663
        %v830 = vunpack.c.l.b16 %v664
        %v831 = vunpack.c.h.b16 %v664
        %v832 = vunpack.c.l.b16 %v665
        %v833 = vunpack.c.h.b16 %v665
        %v834 = vunpack.c.l.b16 %v666
        %v835 = vunpack.c.h.b16 %v666
        %v836 = vunpack.c.l.b16 %v667
        %v837 = vunpack.c.h.b16 %v667
        %v838 = vunpack.c.l.b16 %v668
        %v839 = vunpack.c.h.b16 %v668
        %v840 = vunpack.c.l.b16 %v669
        %v841 = vunpack.c.h.b16 %v669
        %v842 = vunpack.c.l.b16 %v670
        %v843 = vunpack.c.h.b16 %v670
        %v844 = vunpack.c.l.b16 %v671
        %v845 = vunpack.c.h.b16 %v671
        %v846 = vunpack.c.l.b16 %v672
        %v847 = vunpack.c.h.b16 %v672
        %v848 = vunpack.c.l.b16 %v673
        %v849 = vunpack.c.h.b16 %v673
        %v850 = vunpack.c.l.b16 %v674
        %v851 = vunpack.c.h.b16 %v674
        %v852 = vunpack.c.l.b16 %v675
        %v853 = vunpack.c.h.b16 %v675
        %v854 = vunpack.c.l.b16 %v676
        %v855 = vunpack.c.h.b16 %v676
        %v856 = vunpack.c.l.b16 %v677
        %v857 = vunpack.c.h.b16 %v677
        %v858 = vunpack.c.l.b16 %v678
        %v859 = vunpack.c.h.b16 %v678
        %v860 = vunpack.c.l.b16 %v679
        %v861 = vunpack.c.h.b16 %v679
        %v862 = vunpack.c.l.b16 %v680
        %v863 = vunpack.c.h.b16 %v680
        %v864 = vunpack.c.l.b16 %v681
        %v865 = vunpack.c.h.b16 %v681
        %v866 = vunpack.c.l.b16 %v682
        %v867 = vunpack.c.h.b16 %v682
        %v868 = vunpack.c.l.b16 %v683
        %v869 = vunpack.c.h.b16 %v683
        %v870 = vunpack.c.l.b16 %v684
        %v871 = vunpack.c.h.b16 %v684
        %v872 = vunpack.c.l.b16 %v685
        %v873 = vunpack.c.h.b16 %v685
        %v874 = vunpack.c.l.b16 %v686
        %v875 = vunpack.c.h.b16 %v686
        %v876 = vunpack.c.l.b16 %v687
        %v877 = vunpack.c.h.b16 %v687
        %v878 = vunpack.c.l.b16 %v688
        %v879 = vunpack.c.h.b16 %v688
        %v880 = vunpack.c.l.b16 %v689
        %v881 = vunpack.c.h.b16 %v689
        %v882 = vpack.c.b16 %v758, %v754
        %v883 = vpack.c.b16 %v759, %v755
        %v884 = vpack.c.b16 %v760, %v756
        %v885 = vpack.c.b16 %v761, %v757
        %v886 = vpack.c.b16 %v766, %v762
        %v887 = vpack.c.b16 %v767, %v763
        %v888 = vpack.c.b16 %v768, %v764
        %v889 = vpack.c.b16 %v769, %v765
        %v890 = vpack.c.b16 %v774, %v770
        %v891 = vpack.c.b16 %v775, %v771
        %v892 = vpack.c.b16 %v776, %v772
        %v893 = vpack.c.b16 %v777, %v773
        %v894 = vpack.c.b16 %v782, %v778
        %v895 = vpack.c.b16 %v783, %v779
        %v896 = vpack.c.b16 %v784, %v780
        %v897 = vpack.c.b16 %v785, %v781
        %v898 = vpack.c.b16 %v790, %v786
        %v899 = vpack.c.b16 %v791, %v787
        %v900 = vpack.c.b16 %v792, %v788
        %v901 = vpack.c.b16 %v793, %v789
        %v902 = vpack.c.b16 %v798, %v794
        %v903 = vpack.c.b16 %v799, %v795
        %v904 = vpack.c.b16 %v800, %v796
        %v905 = vpack.c.b16 %v801, %v797
        %v906 = vpack.c.b16 %v806, %v802
        %v907 = vpack.c.b16 %v807, %v803
        %v908 = vpack.c.b16 %v808, %v804
        %v909 = vpack.c.b16 %v809, %v805
        %v910 = vpack.c.b16 %v814, %v810
        %v911 = vpack.c.b16 %v815, %v811
        %v912 = vpack.c.b16 %v816, %v812
        %v913 = vpack.c.b16 %v817, %v813
        %v914 = vpack.c.b16 %v822, %v818
        %v915 = vpack.c.b16 %v823, %v819
        %v916 = vpack.c.b16 %v824, %v820
        %v917 = vpack.c.b16 %v825, %v821
        %v918 = vpack.c.b16 %v830, %v826
        %v919 = vpack.c.b16 %v831, %v827
        %v920 = vpack.c.b16 %v832, %v828
        %v921 = vpack.c.b16 %v833, %v829
        %v922 = vpack.c.b16 %v838, %v834
        %v923 = vpack.c.b16 %v839, %v835
        %v924 = vpack.c.b16 %v840, %v836
        %v925 = vpack.c.b16 %v841, %v837
        %v926 = vpack.c.b16 %v846, %v842
        %v927 = vpack.c.b16 %v847, %v843
        %v928 = vpack.c.b16 %v848, %v844
        %v929 = vpack.c.b16 %v849, %v845
        %v930 = vpack.c.b16 %v854, %v850
        %v931 = vpack.c.b16 %v855, %v851
        %v932 = vpack.c.b16 %v856, %v852
        %v933 = vpack.c.b16 %v857, %v853
        %v934 = vpack.c.b16 %v862, %v858
        %v935 = vpack.c.b16 %v863, %v859
        %v936 = vpack.c.b16 %v864, %v860
        %v937 = vpack.c.b16 %v865, %v861
        %v938 = vpack.c.b16 %v870, %v866
        %v939 = vpack.c.b16 %v871, %v867
        %v940 = vpack.c.b16 %v872, %v868
        %v941 = vpack.c.b16 %v873, %v869
        %v942 = vpack.c.b16 %v878, %v874
        %v943 = vpack.c.b16 %v879, %v875
        %v944 = vpack.c.b16 %v880, %v876
        %v945 = vpack.c.b16 %v881, %v877
        %1010 = vmatprep.subr.bf16.mxu0 %v911
        %1011 = vmatpush1.bf16.msra.mxu0 %v910
        %1012 = vmatprep.subr.bf16.mxu0 %v907
        %1013 = vmatpush1.bf16.msra.mxu0 %v906
        %1014 = vmatprep.subr.bf16.mxu0 %v903
        %1015 = vmatpush1.bf16.msra.mxu0 %v902
        %1016 = vmatprep.subr.bf16.mxu0 %v899
        %1017 = vmatpush1.bf16.msra.mxu0 %v898
        %1018 = vmatprep.subr.bf16.mxu0 %v895
        %1019 = vmatpush1.bf16.msra.mxu0 %v894
        %1020 = vmatprep.subr.bf16.mxu0 %v891
        %1021 = vmatpush1.bf16.msra.mxu0 %v890
        %1022 = vmatprep.subr.bf16.mxu0 %v887
        %1023 = vmatpush1.bf16.msra.mxu0 %v886
        %1024 = vmatprep.subr.bf16.mxu0 %v883
        %1025 = vmatpush1.bf16.msra.mxu0 %v882
        %1026 = vmatprep.subr.bf16.mxu0 %v943
        %1027 = vmatpush2.bf16.msra.mxu0 %v942
        %1028 = vmatprep.subr.bf16.mxu0 %v939
        %1029 = vmatpush2.bf16.msra.mxu0 %v938
        %1030 = vmatprep.subr.bf16.mxu0 %v935
        %1031 = vmatpush2.bf16.msra.mxu0 %v934
        %1032 = vmatprep.subr.bf16.mxu0 %v931
        %1033 = vmatpush2.bf16.msra.mxu0 %v930
        %1034 = vmatprep.subr.bf16.mxu0 %v927
        %1035 = vmatpush2.bf16.msra.mxu0 %v926
        %1036 = vmatprep.subr.bf16.mxu0 %v923
        %1037 = vmatpush2.bf16.msra.mxu0 %v922
        %1038 = vmatprep.subr.bf16.mxu0 %v919
        %1039 = vmatpush2.bf16.msra.mxu0 %v918
        %1040 = vmatprep.subr.bf16.mxu0 %v915
        %1041 = vmatpush2.bf16.msra.mxu0 %v914
        %1042 = vmatprep.mubr.bf16.mxu0 %v392
        %1043 = vmatmul.mubr.bf16.gmra.mxu0 %v391
        %v1044 = vpop.f32.mrf.mxu0
        %v1045 = vadd.f32 0.0, %v1044
        %v1046 = vpop.f32.mrf.mxu0
        %v1047 = vadd.f32 0.0, %v1046
        %v1048 = vpop.f32.mrf.mxu0
        %v1049 = vpop.f32.mrf.mxu0
        %1050 = vdwg.mxu0
        %1051 = vmatprep.subr.bf16.mxu0 %v913
        %1052 = vmatpush1.bf16.msra.mxu0 %v912
        %1053 = vmatprep.subr.bf16.mxu0 %v909
        %1054 = vmatpush1.bf16.msra.mxu0 %v908
        %1055 = vmatprep.subr.bf16.mxu0 %v905
        %1056 = vmatpush1.bf16.msra.mxu0 %v904
        %1057 = vmatprep.subr.bf16.mxu0 %v901
        %1058 = vmatpush1.bf16.msra.mxu0 %v900
        %1059 = vmatprep.subr.bf16.mxu0 %v897
        %1060 = vmatpush1.bf16.msra.mxu0 %v896
        %1061 = vmatprep.subr.bf16.mxu0 %v893
        %1062 = vmatpush1.bf16.msra.mxu0 %v892
        %1063 = vmatprep.subr.bf16.mxu0 %v889
        %1064 = vmatpush1.bf16.msra.mxu0 %v888
        %1065 = vmatprep.subr.bf16.mxu0 %v885
        %1066 = vmatpush1.bf16.msra.mxu0 %v884
        %1067 = vmatprep.subr.bf16.mxu0 %v945
        %1068 = vmatpush2.bf16.msra.mxu0 %v944
        %1069 = vmatprep.subr.bf16.mxu0 %v941
        %1070 = vmatpush2.bf16.msra.mxu0 %v940
        %1071 = vmatprep.subr.bf16.mxu0 %v937
        %1072 = vmatpush2.bf16.msra.mxu0 %v936
        %1073 = vmatprep.subr.bf16.mxu0 %v933
        %1074 = vmatpush2.bf16.msra.mxu0 %v932
        %1075 = vmatprep.subr.bf16.mxu0 %v929
        %1076 = vmatpush2.bf16.msra.mxu0 %v928
        %1077 = vmatprep.subr.bf16.mxu0 %v925
        %1078 = vmatpush2.bf16.msra.mxu0 %v924
        %1079 = vmatprep.subr.bf16.mxu0 %v921
        %1080 = vmatpush2.bf16.msra.mxu0 %v920
        %1081 = vmatprep.subr.bf16.mxu0 %v917
        %1082 = vmatpush2.bf16.msra.mxu0 %v916
        %1083 = vmatprep.mubr.bf16.mxu0 %v392
        %1084 = vmatmul.mubr.bf16.gmra.mxu0 %v391
        %v1085 = vpop.f32.mrf.mxu0
        %v1086 = vadd.f32 0.0, %v1085
        %v1087 = vpop.f32.mrf.mxu0
        %v1088 = vadd.f32 0.0, %v1087
        %v1089 = vpop.f32.mrf.mxu0
        %v1090 = vpop.f32.mrf.mxu0
        %1091 = vdwg.mxu0
        %v1092 = vld [vmem:[%s333] sm:$0xff]
        %vm1093 = vcmp.eq.f32.partialorder %v1092, 0.0
        %v1094 = vsel %vm1093, -1e+30, 0.0
        %v1095 = vpack.c.bf16 %v620, %v620
        %v1096 = vpack.c.bf16 %v622, %v622
        %v1097 = vpack.c.bf16 %v1045, %v1045
        %v1098 = vpack.c.bf16 %v1047, %v1047
        %v1099 = vpack.c.bf16 %v1086, %v1086
        %v1100 = vpack.c.bf16 %v1088, %v1088
        %vm1101 = vcmask 523264
        %v1103 = vsel %vm1101, %v1095, 0
        %v1106 = vsel %vm1101, %v1097, 0
        %1108 = vmatprep.subr.bf16.mxu0 0
        %1109 = vmatpush1.bf16.xpose.msra.mxu0 0
        %1110 = vmatprep.subr.bf16.mxu0 0
        %1111 = vmatpush1.bf16.xpose.msra.mxu0 0
        %1112 = vmatprep.subr.bf16.mxu0 0
        %1113 = vmatpush1.bf16.xpose.msra.mxu0 0
        %1114 = vmatprep.subr.bf16.mxu0 0
        %1115 = vmatpush1.bf16.xpose.msra.mxu0 0
        %1116 = vmatprep.subr.bf16.mxu0 0
        %1117 = vmatpush1.bf16.xpose.msra.mxu0 0
        %1118 = vmatprep.subr.bf16.mxu0 0
        %1119 = vmatpush1.bf16.xpose.msra.mxu0 0
        %1120 = vmatprep.subr.bf16.mxu0 0
        %1121 = vmatpush1.bf16.xpose.msra.mxu0 0
        %1122 = vmatprep.subr.bf16.mxu0 0
        %1123 = vmatpush1.bf16.xpose.msra.mxu0 %v1106
        %1124 = vmatprep.subr.bf16.mxu0 0
        %1125 = vmatpush2.bf16.xpose.msra.mxu0 0
        %1126 = vmatprep.subr.bf16.mxu0 0
        %1127 = vmatpush2.bf16.xpose.msra.mxu0 0
        %1128 = vmatprep.subr.bf16.mxu0 0
        %1129 = vmatpush2.bf16.xpose.msra.mxu0 0
        %1130 = vmatprep.subr.bf16.mxu0 0
        %1131 = vmatpush2.bf16.xpose.msra.mxu0 0
        %1132 = vmatprep.subr.bf16.mxu0 0
        %1133 = vmatpush2.bf16.xpose.msra.mxu0 0
        %1134 = vmatprep.subr.bf16.mxu0 0
        %1135 = vmatpush2.bf16.xpose.msra.mxu0 0
        %1136 = vmatprep.subr.bf16.mxu0 0
        %1137 = vmatpush2.bf16.xpose.msra.mxu0 0
        %1138 = vmatprep.subr.bf16.mxu0 0
        %1139 = vmatpush2.bf16.xpose.msra.mxu0 0
        %1140 = vmatprep.mubr.bf16.mxu0 0
        %1141 = vmatmul.mubr.bf16.gmra.mxu0 %v1103
        %v1142 = vpop.f32.mrf.mxu0
        %v1143 = vadd.f32 %v1094, %v1142
        %v1144 = vpop.f32.mrf.mxu0
        %v1145 = vpop.f32.mrf.mxu0
        %v1146 = vpop.f32.mrf.mxu0
        %1147 = vdwg.mxu0
        %vm1148 = vcmask 64512
        %v1149 = vsel %vm1148, %v1143, -inf
        %1150 = vmax.xlane.f32.xlu0 %v1149
        %v1151 = vpop.xlane.xlu0 %1150
        %v1152 = vsub.f32 %v1143, %v1151
        %v1153 = vmul.f32 %v1152, 1.442695
        %v1154 = vpow.pop %v1153
        %v1155 = vsel %vm1148, %v1154, 0.0
        %1156 = vadd.xlane.f32.xlu0 %v1155
        %v1157 = vpop.xlane.xlu0 %1156
        %v1158 = vpack.c.bf16 %v1154, %v1154
        %v1160 = vsel %vm1148, %v1158, 0
        %vm1162 = vcmask 1043456
        %v1164 = vsel %vm1162, %v1099, 0
        %1166 = vmatprep.subr.bf16.mxu0 0
        %1167 = vmatpush1.bf16.msra.mxu0 0
        %1168 = vmatprep.subr.bf16.mxu0 0
        %1169 = vmatpush1.bf16.msra.mxu0 0
        %1170 = vmatprep.subr.bf16.mxu0 0
        %1171 = vmatpush1.bf16.msra.mxu0 0
        %1172 = vmatprep.subr.bf16.mxu0 0
        %1173 = vmatpush1.bf16.msra.mxu0 0
        %1174 = vmatprep.subr.bf16.mxu0 0
        %1175 = vmatpush1.bf16.msra.mxu0 0
        %1176 = vmatprep.subr.bf16.mxu0 0
        %1177 = vmatpush1.bf16.msra.mxu0 0
        %1178 = vmatprep.subr.bf16.mxu0 0
        %1179 = vmatpush1.bf16.msra.mxu0 0
        %1180 = vmatprep.subr.bf16.mxu0 0
        %1181 = vmatpush1.bf16.msra.mxu0 %v1164
        %1182 = vmatprep.subr.bf16.mxu0 0
        %1183 = vmatpush2.bf16.msra.mxu0 0
        %1184 = vmatprep.subr.bf16.mxu0 0
        %1185 = vmatpush2.bf16.msra.mxu0 0
        %1186 = vmatprep.subr.bf16.mxu0 0
        %1187 = vmatpush2.bf16.msra.mxu0 0
        %1188 = vmatprep.subr.bf16.mxu0 0
        %1189 = vmatpush2.bf16.msra.mxu0 0
        %1190 = vmatprep.subr.bf16.mxu0 0
        %1191 = vmatpush2.bf16.msra.mxu0 0
        %1192 = vmatprep.subr.bf16.mxu0 0
        %1193 = vmatpush2.bf16.msra.mxu0 0
        %1194 = vmatprep.subr.bf16.mxu0 0
        %1195 = vmatpush2.bf16.msra.mxu0 0
        %1196 = vmatprep.subr.bf16.mxu0 0
        %1197 = vmatpush2.bf16.msra.mxu0 0
        %1198 = vmatprep.mubr.bf16.mxu0 0
        %1199 = vmatmul.mubr.bf16.gmra.mxu0 %v1160
        %v1200 = vpop.f32.mrf.mxu0
        %v1201 = vadd.f32 0.0, %v1200
        %v1202 = vpop.f32.mrf.mxu0
        %v1203 = vpop.f32.mrf.mxu0
        %v1204 = vpop.f32.mrf.mxu0
        %1205 = vdwg.mxu0
        %v1206 = vrcp.pop %v1157
        %v1207 = vmul.f32 %v1201, %v1206
        %1209 = vrot.lane.b32.xlu0 %v1095, 64
        %v1210 = vpop.permute.xlu0 %1209
        %1212 = vrot.lane.b32.xlu0 %v1097, 64
        %v1213 = vpop.permute.xlu0 %1212
        %v1215 = vsel %vm1101, %v1210, 0
        %v1218 = vsel %vm1101, %v1213, 0
        %1220 = vmatprep.subr.bf16.mxu0 0
        %1221 = vmatpush1.bf16.xpose.msra.mxu0 0
        %1222 = vmatprep.subr.bf16.mxu0 0
        %1223 = vmatpush1.bf16.xpose.msra.mxu0 0
        %1224 = vmatprep.subr.bf16.mxu0 0
        %1225 = vmatpush1.bf16.xpose.msra.mxu0 0
        %1226 = vmatprep.subr.bf16.mxu0 0
        %1227 = vmatpush1.bf16.xpose.msra.mxu0 0
        %1228 = vmatprep.subr.bf16.mxu0 0
        %1229 = vmatpush1.bf16.xpose.msra.mxu0 0
        %1230 = vmatprep.subr.bf16.mxu0 0
        %1231 = vmatpush1.bf16.xpose.msra.mxu0 0
        %1232 = vmatprep.subr.bf16.mxu0 0
        %1233 = vmatpush1.bf16.xpose.msra.mxu0 0
        %1234 = vmatprep.subr.bf16.mxu0 0
        %1235 = vmatpush1.bf16.xpose.msra.mxu0 %v1218
        %1236 = vmatprep.subr.bf16.mxu0 0
        %1237 = vmatpush2.bf16.xpose.msra.mxu0 0
        %1238 = vmatprep.subr.bf16.mxu0 0
        %1239 = vmatpush2.bf16.xpose.msra.mxu0 0
        %1240 = vmatprep.subr.bf16.mxu0 0
        %1241 = vmatpush2.bf16.xpose.msra.mxu0 0
        %1242 = vmatprep.subr.bf16.mxu0 0
        %1243 = vmatpush2.bf16.xpose.msra.mxu0 0
        %1244 = vmatprep.subr.bf16.mxu0 0
        %1245 = vmatpush2.bf16.xpose.msra.mxu0 0
        %1246 = vmatprep.subr.bf16.mxu0 0
        %1247 = vmatpush2.bf16.xpose.msra.mxu0 0
        %1248 = vmatprep.subr.bf16.mxu0 0
        %1249 = vmatpush2.bf16.xpose.msra.mxu0 0
        %1250 = vmatprep.subr.bf16.mxu0 0
        %1251 = vmatpush2.bf16.xpose.msra.mxu0 0
        %1252 = vmatprep.mubr.bf16.mxu0 0
        %1253 = vmatmul.mubr.bf16.gmra.mxu0 %v1215
        %v1254 = vpop.f32.mrf.mxu0
        %v1255 = vadd.f32 %v1094, %v1254
        %v1256 = vpop.f32.mrf.mxu0
        %v1257 = vpop.f32.mrf.mxu0
        %v1258 = vpop.f32.mrf.mxu0
        %1259 = vdwg.mxu0
        %v1260 = vsel %vm1148, %v1255, -inf
        %1261 = vmax.xlane.f32.xlu0 %v1260
        %v1262 = vpop.xlane.xlu0 %1261
        %v1263 = vsub.f32 %v1255, %v1262
        %v1264 = vmul.f32 %v1263, 1.442695
        %v1265 = vpow.pop %v1264
        %v1266 = vsel %vm1148, %v1265, 0.0
        %1267 = vadd.xlane.f32.xlu0 %v1266
        %v1268 = vpop.xlane.xlu0 %1267
        %v1269 = vpack.c.bf16 %v1265, %v1265
        %1271 = vrot.lane.b32.xlu0 %v1099, 64
        %v1272 = vpop.permute.xlu0 %1271
        %v1274 = vsel %vm1148, %v1269, 0
        %v1277 = vsel %vm1162, %v1272, 0
        %1279 = vmatprep.subr.bf16.mxu0 0
        %1280 = vmatpush1.bf16.msra.mxu0 0
        %1281 = vmatprep.subr.bf16.mxu0 0
        %1282 = vmatpush1.bf16.msra.mxu0 0
        %1283 = vmatprep.subr.bf16.mxu0 0
        %1284 = vmatpush1.bf16.msra.mxu0 0
        %1285 = vmatprep.subr.bf16.mxu0 0
        %1286 = vmatpush1.bf16.msra.mxu0 0
        %1287 = vmatprep.subr.bf16.mxu0 0
        %1288 = vmatpush1.bf16.msra.mxu0 0
        %1289 = vmatprep.subr.bf16.mxu0 0
        %1290 = vmatpush1.bf16.msra.mxu0 0
        %1291 = vmatprep.subr.bf16.mxu0 0
        %1292 = vmatpush1.bf16.msra.mxu0 0
        %1293 = vmatprep.subr.bf16.mxu0 0
        %1294 = vmatpush1.bf16.msra.mxu0 %v1277
        %1295 = vmatprep.subr.bf16.mxu0 0
        %1296 = vmatpush2.bf16.msra.mxu0 0
        %1297 = vmatprep.subr.bf16.mxu0 0
        %1298 = vmatpush2.bf16.msra.mxu0 0
        %1299 = vmatprep.subr.bf16.mxu0 0
        %1300 = vmatpush2.bf16.msra.mxu0 0
        %1301 = vmatprep.subr.bf16.mxu0 0
        %1302 = vmatpush2.bf16.msra.mxu0 0
        %1303 = vmatprep.subr.bf16.mxu0 0
        %1304 = vmatpush2.bf16.msra.mxu0 0
        %1305 = vmatprep.subr.bf16.mxu0 0
        %1306 = vmatpush2.bf16.msra.mxu0 0
        %1307 = vmatprep.subr.bf16.mxu0 0
        %1308 = vmatpush2.bf16.msra.mxu0 0
        %1309 = vmatprep.subr.bf16.mxu0 0
        %1310 = vmatpush2.bf16.msra.mxu0 0
        %1311 = vmatprep.mubr.bf16.mxu0 0
        %1312 = vmatmul.mubr.bf16.gmra.mxu0 %v1274
        %v1313 = vpop.f32.mrf.mxu0
        %v1314 = vadd.f32 0.0, %v1313
        %v1315 = vpop.f32.mrf.mxu0
        %v1316 = vpop.f32.mrf.mxu0
        %v1317 = vpop.f32.mrf.mxu0
        %1318 = vdwg.mxu0
        %v1319 = vrcp.pop %v1268
        %v1320 = vmul.f32 %v1314, %v1319
        %v1322 = vsel %vm1101, %v1096, 0
        %v1325 = vsel %vm1101, %v1098, 0
        %1327 = vmatprep.subr.bf16.mxu0 0
        %1328 = vmatpush1.bf16.xpose.msra.mxu0 0
        %1329 = vmatprep.subr.bf16.mxu0 0
        %1330 = vmatpush1.bf16.xpose.msra.mxu0 0
        %1331 = vmatprep.subr.bf16.mxu0 0
        %1332 = vmatpush1.bf16.xpose.msra.mxu0 0
        %1333 = vmatprep.subr.bf16.mxu0 0
        %1334 = vmatpush1.bf16.xpose.msra.mxu0 0
        %1335 = vmatprep.subr.bf16.mxu0 0
        %1336 = vmatpush1.bf16.xpose.msra.mxu0 0
        %1337 = vmatprep.subr.bf16.mxu0 0
        %1338 = vmatpush1.bf16.xpose.msra.mxu0 0
        %1339 = vmatprep.subr.bf16.mxu0 0
        %1340 = vmatpush1.bf16.xpose.msra.mxu0 0
        %1341 = vmatprep.subr.bf16.mxu0 0
        %1342 = vmatpush1.bf16.xpose.msra.mxu0 %v1325
        %1343 = vmatprep.subr.bf16.mxu0 0
        %1344 = vmatpush2.bf16.xpose.msra.mxu0 0
        %1345 = vmatprep.subr.bf16.mxu0 0
        %1346 = vmatpush2.bf16.xpose.msra.mxu0 0
        %1347 = vmatprep.subr.bf16.mxu0 0
        %1348 = vmatpush2.bf16.xpose.msra.mxu0 0
        %1349 = vmatprep.subr.bf16.mxu0 0
        %1350 = vmatpush2.bf16.xpose.msra.mxu0 0
        %1351 = vmatprep.subr.bf16.mxu0 0
        %1352 = vmatpush2.bf16.xpose.msra.mxu0 0
        %1353 = vmatprep.subr.bf16.mxu0 0
        %1354 = vmatpush2.bf16.xpose.msra.mxu0 0
        %1355 = vmatprep.subr.bf16.mxu0 0
        %1356 = vmatpush2.bf16.xpose.msra.mxu0 0
        %1357 = vmatprep.subr.bf16.mxu0 0
        %1358 = vmatpush2.bf16.xpose.msra.mxu0 0
        %1359 = vmatprep.mubr.bf16.mxu0 0
        %1360 = vmatmul.mubr.bf16.gmra.mxu0 %v1322
        %v1361 = vpop.f32.mrf.mxu0
        %v1362 = vadd.f32 %v1094, %v1361
        %v1363 = vpop.f32.mrf.mxu0
        %v1364 = vpop.f32.mrf.mxu0
        %v1365 = vpop.f32.mrf.mxu0
        %1366 = vdwg.mxu0
        %v1367 = vsel %vm1148, %v1362, -inf
        %1368 = vmax.xlane.f32.xlu0 %v1367
        %v1369 = vpop.xlane.xlu0 %1368
        %v1370 = vsub.f32 %v1362, %v1369
        %v1371 = vmul.f32 %v1370, 1.442695
        %v1372 = vpow.pop %v1371
        %v1373 = vsel %vm1148, %v1372, 0.0
        %1374 = vadd.xlane.f32.xlu0 %v1373
        %v1375 = vpop.xlane.xlu0 %1374
        %v1376 = vpack.c.bf16 %v1372, %v1372
        %v1378 = vsel %vm1148, %v1376, 0
        %v1381 = vsel %vm1162, %v1100, 0
        %1383 = vmatprep.subr.bf16.mxu0 0
        %1384 = vmatpush1.bf16.msra.mxu0 0
        %1385 = vmatprep.subr.bf16.mxu0 0
        %1386 = vmatpush1.bf16.msra.mxu0 0
        %1387 = vmatprep.subr.bf16.mxu0 0
        %1388 = vmatpush1.bf16.msra.mxu0 0
        %1389 = vmatprep.subr.bf16.mxu0 0
        %1390 = vmatpush1.bf16.msra.mxu0 0
        %1391 = vmatprep.subr.bf16.mxu0 0
        %1392 = vmatpush1.bf16.msra.mxu0 0
        %1393 = vmatprep.subr.bf16.mxu0 0
        %1394 = vmatpush1.bf16.msra.mxu0 0
        %1395 = vmatprep.subr.bf16.mxu0 0
        %1396 = vmatpush1.bf16.msra.mxu0 0
        %1397 = vmatprep.subr.bf16.mxu0 0
        %1398 = vmatpush1.bf16.msra.mxu0 %v1381
        %1399 = vmatprep.subr.bf16.mxu0 0
        %1400 = vmatpush2.bf16.msra.mxu0 0
        %1401 = vmatprep.subr.bf16.mxu0 0
        %1402 = vmatpush2.bf16.msra.mxu0 0
        %1403 = vmatprep.subr.bf16.mxu0 0
        %1404 = vmatpush2.bf16.msra.mxu0 0
        %1405 = vmatprep.subr.bf16.mxu0 0
        %1406 = vmatpush2.bf16.msra.mxu0 0
        %1407 = vmatprep.subr.bf16.mxu0 0
        %1408 = vmatpush2.bf16.msra.mxu0 0
        %1409 = vmatprep.subr.bf16.mxu0 0
        %1410 = vmatpush2.bf16.msra.mxu0 0
        %1411 = vmatprep.subr.bf16.mxu0 0
        %1412 = vmatpush2.bf16.msra.mxu0 0
        %1413 = vmatprep.subr.bf16.mxu0 0
        %1414 = vmatpush2.bf16.msra.mxu0 0
        %1415 = vmatprep.mubr.bf16.mxu0 0
        %1416 = vmatmul.mubr.bf16.gmra.mxu0 %v1378
        %v1417 = vpop.f32.mrf.mxu0
        %v1418 = vadd.f32 0.0, %v1417
        %v1419 = vpop.f32.mrf.mxu0
        %v1420 = vpop.f32.mrf.mxu0
        %v1421 = vpop.f32.mrf.mxu0
        %1422 = vdwg.mxu0
        %v1423 = vrcp.pop %v1375
        %v1424 = vmul.f32 %v1418, %v1423
        %1426 = vrot.lane.b32.xlu0 %v1096, 64
        %v1427 = vpop.permute.xlu0 %1426
        %1429 = vrot.lane.b32.xlu0 %v1098, 64
        %v1430 = vpop.permute.xlu0 %1429
        %v1432 = vsel %vm1101, %v1427, 0
        %v1435 = vsel %vm1101, %v1430, 0
        %1437 = vmatprep.subr.bf16.mxu0 0
        %1438 = vmatpush1.bf16.xpose.msra.mxu0 0
        %1439 = vmatprep.subr.bf16.mxu0 0
        %1440 = vmatpush1.bf16.xpose.msra.mxu0 0
        %1441 = vmatprep.subr.bf16.mxu0 0
        %1442 = vmatpush1.bf16.xpose.msra.mxu0 0
        %1443 = vmatprep.subr.bf16.mxu0 0
        %1444 = vmatpush1.bf16.xpose.msra.mxu0 0
        %1445 = vmatprep.subr.bf16.mxu0 0
        %1446 = vmatpush1.bf16.xpose.msra.mxu0 0
        %1447 = vmatprep.subr.bf16.mxu0 0
        %1448 = vmatpush1.bf16.xpose.msra.mxu0 0
        %1449 = vmatprep.subr.bf16.mxu0 0
        %1450 = vmatpush1.bf16.xpose.msra.mxu0 0
        %1451 = vmatprep.subr.bf16.mxu0 0
        %1452 = vmatpush1.bf16.xpose.msra.mxu0 %v1435
        %1453 = vmatprep.subr.bf16.mxu0 0
        %1454 = vmatpush2.bf16.xpose.msra.mxu0 0
        %1455 = vmatprep.subr.bf16.mxu0 0
        %1456 = vmatpush2.bf16.xpose.msra.mxu0 0
        %1457 = vmatprep.subr.bf16.mxu0 0
        %1458 = vmatpush2.bf16.xpose.msra.mxu0 0
        %1459 = vmatprep.subr.bf16.mxu0 0
        %1460 = vmatpush2.bf16.xpose.msra.mxu0 0
        %1461 = vmatprep.subr.bf16.mxu0 0
        %1462 = vmatpush2.bf16.xpose.msra.mxu0 0
        %1463 = vmatprep.subr.bf16.mxu0 0
        %1464 = vmatpush2.bf16.xpose.msra.mxu0 0
        %1465 = vmatprep.subr.bf16.mxu0 0
        %1466 = vmatpush2.bf16.xpose.msra.mxu0 0
        %1467 = vmatprep.subr.bf16.mxu0 0
        %1468 = vmatpush2.bf16.xpose.msra.mxu0 0
        %1469 = vmatprep.mubr.bf16.mxu0 0
        %1470 = vmatmul.mubr.bf16.gmra.mxu0 %v1432
        %v1471 = vpop.f32.mrf.mxu0
        %v1472 = vadd.f32 %v1094, %v1471
        %v1473 = vpop.f32.mrf.mxu0
        %v1474 = vpop.f32.mrf.mxu0
        %v1475 = vpop.f32.mrf.mxu0
        %1476 = vdwg.mxu0
        %v1477 = vsel %vm1148, %v1472, -inf
        %1478 = vmax.xlane.f32.xlu0 %v1477
        %v1479 = vpop.xlane.xlu0 %1478
        %v1480 = vsub.f32 %v1472, %v1479
        %v1481 = vmul.f32 %v1480, 1.442695
        %v1482 = vpow.pop %v1481
        %v1483 = vsel %vm1148, %v1482, 0.0
        %1484 = vadd.xlane.f32.xlu0 %v1483
        %v1485 = vpop.xlane.xlu0 %1484
        %v1486 = vpack.c.bf16 %v1482, %v1482
        %1488 = vrot.lane.b32.xlu0 %v1100, 64
        %v1489 = vpop.permute.xlu0 %1488
        %v1491 = vsel %vm1148, %v1486, 0
        %v1494 = vsel %vm1162, %v1489, 0
        %1496 = vmatprep.subr.bf16.mxu0 0
        %1497 = vmatpush1.bf16.msra.mxu0 0
        %1498 = vmatprep.subr.bf16.mxu0 0
        %1499 = vmatpush1.bf16.msra.mxu0 0
        %1500 = vmatprep.subr.bf16.mxu0 0
        %1501 = vmatpush1.bf16.msra.mxu0 0
        %1502 = vmatprep.subr.bf16.mxu0 0
        %1503 = vmatpush1.bf16.msra.mxu0 0
        %1504 = vmatprep.subr.bf16.mxu0 0
        %1505 = vmatpush1.bf16.msra.mxu0 0
        %1506 = vmatprep.subr.bf16.mxu0 0
        %1507 = vmatpush1.bf16.msra.mxu0 0
        %1508 = vmatprep.subr.bf16.mxu0 0
        %1509 = vmatpush1.bf16.msra.mxu0 0
        %1510 = vmatprep.subr.bf16.mxu0 0
        %1511 = vmatpush1.bf16.msra.mxu0 %v1494
        %1512 = vmatprep.subr.bf16.mxu0 0
        %1513 = vmatpush2.bf16.msra.mxu0 0
        %1514 = vmatprep.subr.bf16.mxu0 0
        %1515 = vmatpush2.bf16.msra.mxu0 0
        %1516 = vmatprep.subr.bf16.mxu0 0
        %1517 = vmatpush2.bf16.msra.mxu0 0
        %1518 = vmatprep.subr.bf16.mxu0 0
        %1519 = vmatpush2.bf16.msra.mxu0 0
        %1520 = vmatprep.subr.bf16.mxu0 0
        %1521 = vmatpush2.bf16.msra.mxu0 0
        %1522 = vmatprep.subr.bf16.mxu0 0
        %1523 = vmatpush2.bf16.msra.mxu0 0
        %1524 = vmatprep.subr.bf16.mxu0 0
        %1525 = vmatpush2.bf16.msra.mxu0 0
        %1526 = vmatprep.subr.bf16.mxu0 0
        %1527 = vmatpush2.bf16.msra.mxu0 0
        %1528 = vmatprep.mubr.bf16.mxu0 0
        %1529 = vmatmul.mubr.bf16.gmra.mxu0 %v1491
        %v1530 = vpop.f32.mrf.mxu0
        %v1531 = vadd.f32 0.0, %v1530
        %v1532 = vpop.f32.mrf.mxu0
        %v1533 = vpop.f32.mrf.mxu0
        %v1534 = vpop.f32.mrf.mxu0
        %1535 = vdwg.mxu0
        %v1536 = vrcp.pop %v1485
        %v1537 = vmul.f32 %v1531, %v1536
        %1539 = vrot.lane.b32.xlu0 %v1320, 64
        %v1540 = vpop.permute.xlu0 %1539
        %1543 = vrot.lane.b32.xlu0 %v1537, 64
        %v1544 = vpop.permute.xlu0 %1543
        %v1546 = vsel %vm1101, %v1207, %v1540
        %v1547 = vsel %vm1101, %v1424, %v1544
        %v1548 = vpack.c.bf16 %v1546, %v1546
        %v1549 = vpack.c.bf16 %v1547, %v1547
        %v1550 = vld [vmem:[#allocation11] sm:$0xff]
        %v1551 = vld [vmem:[#allocation11 + $0x8] sm:$0xff]
        %v1552 = vld [vmem:[#allocation11 + $0x10] sm:$0xff]
        %v1553 = vld [vmem:[#allocation11 + $0x18] sm:$0xff]
        %v1554 = vld [vmem:[#allocation11 + $0x20] sm:$0xff]
        %v1555 = vld [vmem:[#allocation11 + $0x28] sm:$0xff]
        %v1556 = vld [vmem:[#allocation11 + $0x30] sm:$0xff]
        %v1557 = vld [vmem:[#allocation11 + $0x38] sm:$0xff]
        %v1558 = vld [vmem:[#allocation11 + $0x40] sm:$0xff]
        %v1559 = vld [vmem:[#allocation11 + $0x48] sm:$0xff]
        %v1560 = vld [vmem:[#allocation11 + $0x50] sm:$0xff]
        %v1561 = vld [vmem:[#allocation11 + $0x58] sm:$0xff]
        %v1562 = vld [vmem:[#allocation11 + $0x60] sm:$0xff]
        %v1563 = vld [vmem:[#allocation11 + $0x68] sm:$0xff]
        %v1564 = vld [vmem:[#allocation11 + $0x70] sm:$0xff]
        %v1565 = vld [vmem:[#allocation11 + $0x78] sm:$0xff]
        %v1566 = vld [vmem:[#allocation11 + $0x80] sm:$0xff]
        %v1567 = vld [vmem:[#allocation11 + $0x88] sm:$0xff]
        %v1568 = vld [vmem:[#allocation11 + $0x90] sm:$0xff]
        %v1569 = vld [vmem:[#allocation11 + $0x98] sm:$0xff]
        %v1570 = vld [vmem:[#allocation11 + $0xa0] sm:$0xff]
        %v1571 = vld [vmem:[#allocation11 + $0xa8] sm:$0xff]
        %v1572 = vld [vmem:[#allocation11 + $0xb0] sm:$0xff]
        %v1573 = vld [vmem:[#allocation11 + $0xb8] sm:$0xff]
        %v1574 = vld [vmem:[#allocation11 + $0xc0] sm:$0xff]
        %v1575 = vld [vmem:[#allocation11 + $0xc8] sm:$0xff]
        %v1576 = vld [vmem:[#allocation11 + $0xd0] sm:$0xff]
        %v1577 = vld [vmem:[#allocation11 + $0xd8] sm:$0xff]
        %v1578 = vld [vmem:[#allocation11 + $0xe0] sm:$0xff]
        %v1579 = vld [vmem:[#allocation11 + $0xe8] sm:$0xff]
        %v1580 = vld [vmem:[#allocation11 + $0xf0] sm:$0xff]
        %v1581 = vld [vmem:[#allocation11 + $0xf8] sm:$0xff]
        %v1614 = vunpack.c.l.b16 %v1550
        %v1615 = vunpack.c.h.b16 %v1550
        %v1616 = vunpack.c.l.b16 %v1551
        %v1617 = vunpack.c.h.b16 %v1551
        %v1618 = vunpack.c.l.b16 %v1552
        %v1619 = vunpack.c.h.b16 %v1552
        %v1620 = vunpack.c.l.b16 %v1553
        %v1621 = vunpack.c.h.b16 %v1553
        %v1622 = vunpack.c.l.b16 %v1554
        %v1623 = vunpack.c.h.b16 %v1554
        %v1624 = vunpack.c.l.b16 %v1555
        %v1625 = vunpack.c.h.b16 %v1555
        %v1626 = vunpack.c.l.b16 %v1556
        %v1627 = vunpack.c.h.b16 %v1556
        %v1628 = vunpack.c.l.b16 %v1557
        %v1629 = vunpack.c.h.b16 %v1557
        %v1630 = vunpack.c.l.b16 %v1558
        %v1631 = vunpack.c.h.b16 %v1558
        %v1632 = vunpack.c.l.b16 %v1559
        %v1633 = vunpack.c.h.b16 %v1559
        %v1634 = vunpack.c.l.b16 %v1560
        %v1635 = vunpack.c.h.b16 %v1560
        %v1636 = vunpack.c.l.b16 %v1561
        %v1637 = vunpack.c.h.b16 %v1561
        %v1638 = vunpack.c.l.b16 %v1562
        %v1639 = vunpack.c.h.b16 %v1562
        %v1640 = vunpack.c.l.b16 %v1563
        %v1641 = vunpack.c.h.b16 %v1563
        %v1642 = vunpack.c.l.b16 %v1564
        %v1643 = vunpack.c.h.b16 %v1564
        %v1644 = vunpack.c.l.b16 %v1565
        %v1645 = vunpack.c.h.b16 %v1565
        %v1646 = vunpack.c.l.b16 %v1566
        %v1647 = vunpack.c.h.b16 %v1566
        %v1648 = vunpack.c.l.b16 %v1567
        %v1649 = vunpack.c.h.b16 %v1567
        %v1650 = vunpack.c.l.b16 %v1568
        %v1651 = vunpack.c.h.b16 %v1568
        %v1652 = vunpack.c.l.b16 %v1569
        %v1653 = vunpack.c.h.b16 %v1569
        %v1654 = vunpack.c.l.b16 %v1570
        %v1655 = vunpack.c.h.b16 %v1570
        %v1656 = vunpack.c.l.b16 %v1571
        %v1657 = vunpack.c.h.b16 %v1571
        %v1658 = vunpack.c.l.b16 %v1572
        %v1659 = vunpack.c.h.b16 %v1572
        %v1660 = vunpack.c.l.b16 %v1573
        %v1661 = vunpack.c.h.b16 %v1573
        %v1662 = vunpack.c.l.b16 %v1574
        %v1663 = vunpack.c.h.b16 %v1574
        %v1664 = vunpack.c.l.b16 %v1575
        %v1665 = vunpack.c.h.b16 %v1575
        %v1666 = vunpack.c.l.b16 %v1576
        %v1667 = vunpack.c.h.b16 %v1576
        %v1668 = vunpack.c.l.b16 %v1577
        %v1669 = vunpack.c.h.b16 %v1577
        %v1670 = vunpack.c.l.b16 %v1578
        %v1671 = vunpack.c.h.b16 %v1578
        %v1672 = vunpack.c.l.b16 %v1579
        %v1673 = vunpack.c.h.b16 %v1579
        %v1674 = vunpack.c.l.b16 %v1580
        %v1675 = vunpack.c.h.b16 %v1580
        %v1676 = vunpack.c.l.b16 %v1581
        %v1677 = vunpack.c.h.b16 %v1581
        %v1678 = vpack.c.b16 %v1616, %v1614
        %v1679 = vpack.c.b16 %v1617, %v1615
        %v1680 = vpack.c.b16 %v1620, %v1618
        %v1681 = vpack.c.b16 %v1621, %v1619
        %v1682 = vpack.c.b16 %v1624, %v1622
        %v1683 = vpack.c.b16 %v1625, %v1623
        %v1684 = vpack.c.b16 %v1628, %v1626
        %v1685 = vpack.c.b16 %v1629, %v1627
        %v1686 = vpack.c.b16 %v1632, %v1630
        %v1687 = vpack.c.b16 %v1633, %v1631
        %v1688 = vpack.c.b16 %v1636, %v1634
        %v1689 = vpack.c.b16 %v1637, %v1635
        %v1690 = vpack.c.b16 %v1640, %v1638
        %v1691 = vpack.c.b16 %v1641, %v1639
        %v1692 = vpack.c.b16 %v1644, %v1642
        %v1693 = vpack.c.b16 %v1645, %v1643
        %v1694 = vpack.c.b16 %v1648, %v1646
        %v1695 = vpack.c.b16 %v1649, %v1647
        %v1696 = vpack.c.b16 %v1652, %v1650
        %v1697 = vpack.c.b16 %v1653, %v1651
        %v1698 = vpack.c.b16 %v1656, %v1654
        %v1699 = vpack.c.b16 %v1657, %v1655
        %v1700 = vpack.c.b16 %v1660, %v1658
        %v1701 = vpack.c.b16 %v1661, %v1659
        %v1702 = vpack.c.b16 %v1664, %v1662
        %v1703 = vpack.c.b16 %v1665, %v1663
        %v1704 = vpack.c.b16 %v1668, %v1666
        %v1705 = vpack.c.b16 %v1669, %v1667
        %v1706 = vpack.c.b16 %v1672, %v1670
        %v1707 = vpack.c.b16 %v1673, %v1671
        %v1708 = vpack.c.b16 %v1676, %v1674
        %v1709 = vpack.c.b16 %v1677, %v1675
        %1742 = vmatprep.subr.bf16.mxu0 %v1693
        %1743 = vmatpush1.bf16.msra.mxu0 %v1692
        %1744 = vmatprep.subr.bf16.mxu0 %v1691
        %1745 = vmatpush1.bf16.msra.mxu0 %v1690
        %1746 = vmatprep.subr.bf16.mxu0 %v1689
        %1747 = vmatpush1.bf16.msra.mxu0 %v1688
        %1748 = vmatprep.subr.bf16.mxu0 %v1687
        %1749 = vmatpush1.bf16.msra.mxu0 %v1686
        %1750 = vmatprep.subr.bf16.mxu0 %v1685
        %1751 = vmatpush1.bf16.msra.mxu0 %v1684
        %1752 = vmatprep.subr.bf16.mxu0 %v1683
        %1753 = vmatpush1.bf16.msra.mxu0 %v1682
        %1754 = vmatprep.subr.bf16.mxu0 %v1681
        %1755 = vmatpush1.bf16.msra.mxu0 %v1680
        %1756 = vmatprep.subr.bf16.mxu0 %v1679
        %1757 = vmatpush1.bf16.msra.mxu0 %v1678
        %1758 = vmatprep.subr.bf16.mxu0 %v1709
        %1759 = vmatpush2.bf16.msra.mxu0 %v1708
        %1760 = vmatprep.subr.bf16.mxu0 %v1707
        %1761 = vmatpush2.bf16.msra.mxu0 %v1706
        %1762 = vmatprep.subr.bf16.mxu0 %v1705
        %1763 = vmatpush2.bf16.msra.mxu0 %v1704
        %1764 = vmatprep.subr.bf16.mxu0 %v1703
        %1765 = vmatpush2.bf16.msra.mxu0 %v1702
        %1766 = vmatprep.subr.bf16.mxu0 %v1701
        %1767 = vmatpush2.bf16.msra.mxu0 %v1700
        %1768 = vmatprep.subr.bf16.mxu0 %v1699
        %1769 = vmatpush2.bf16.msra.mxu0 %v1698
        %1770 = vmatprep.subr.bf16.mxu0 %v1697
        %1771 = vmatpush2.bf16.msra.mxu0 %v1696
        %1772 = vmatprep.subr.bf16.mxu0 %v1695
        %1773 = vmatpush2.bf16.msra.mxu0 %v1694
        %1774 = vmatprep.mubr.bf16.mxu0 %v1549
        %1775 = vmatmul.mubr.bf16.gmra.mxu0 %v1548
        %v1776 = vpop.f32.mrf.mxu0
        %v1777 = vadd.f32 0.0, %v1776
        %v1778 = vpop.f32.mrf.mxu0
        %v1779 = vadd.f32 0.0, %v1778
        %v1780 = vpop.f32.mrf.mxu0
        %v1781 = vpop.f32.mrf.mxu0
        %1782 = vdwg.mxu0
        %1783 = vst [vmem:[%s383] sm:$0xff] %v1777
        %1784 = vst [vmem:[%s383 + $0x8] sm:$0xff] %v1779
        %s1785 = sand.u32 %s177, 1
        %s1786 = scalar_lea.sflag [#allocation4], %s1785
        %s1787 = sand.u32 %s177, 1
        %s1788 = smul.addr %s1787, 16
        %s1789 = scalar_lea.vmem [#allocation13], %s1788
        // Predicated region
        $region69: #{cross_attention_block.1} parent=43 // pred_check
          %p1790 = pneg %p187
        $region70: #{cross_attention_block.1} parent=43 // pred_check_branch
          %1792 = sbr.rel (%p1790) target = $region72
        $region71: #{cross_attention_block.1} parent=43 // pred_region
          %s1794 = ssub.s32 256, 256
          %1795 = vsyncadd %s1786, %s1794
          %s1796 = smul.addr %s28, 2
          %s1797 = smul.addr %s1796, 128
          %s1798 = scalar_lea.hbm %s6, %s1797
          %s1800 = sshll.u32 %s1789, 4
          %s1801 = int_to_ptr.vmem [resolvable:$true] %s1800
          %1803 = dma.vmem_to_hbm [thread:$0]  %s1801, 256, %s1798, %s1786
        $region72: #{cross_attention_block.1} parent=43 // pred_fallthru
          _
      $region44: #{cross_attention_block.1} parent=5 // pred_fallthru
        _
      %p1804 = scmp.le.s32.totalorder 2, %s23
      // Predicated region
      $region73: #{cross_attention_block.1} parent=5 // pred_check
        %p1805 = pneg %p1804
      $region74: #{cross_attention_block.1} parent=5 // pred_check_branch
        %1807 = sbr.rel (%p1805) target = $region76
      $region75: #{cross_attention_block.1} parent=5 // pred_region
        %s1808 = ssub.s32 %s23, 2
        // Predicated region
        $region77: #{cross_attention_block.1} parent=75 // pred_check
          %p1809 = pneg %p193
        $region78: #{cross_attention_block.1} parent=75 // pred_check_branch
          %1811 = sbr.rel (%p1809) target = $region80
        $region79: #{cross_attention_block.1} parent=75 // pred_region
          %s1812 = sand.u32 %s178, 1
          %s1813 = scalar_lea.sflag [#allocation4], %s1812
          %s1814 = sand.u32 %s178, 1
          %s1815 = smul.addr %s1814, 16
          %s1816 = scalar_lea.vmem [#allocation13], %s1815
          %1817 = dma.done %s1813, 256
        $region80: #{cross_attention_block.1} parent=75 // pred_fallthru
          _
      $region76: #{cross_attention_block.1} parent=5 // pred_fallthru
        _
    $region6: #{cross_attention_block.1} parent=1 // loop_footer
      %s27 = sadd.s32 1, %s23
    $region7: #{cross_attention_block.1} parent=1 // loop_footer_branch
      %22 = sbr.rel target = $region3
    $region8: #{cross_attention_block.1} parent=1 // loop_exit
      _
    %1818 = vsyncpa [#allocation3], 1
    %s1819 = scalar_lea.sflag [#allocation3], 1
    %1820 = vsyncpa %s1819, 1
    %1821 = vsyncpa [#allocation6], 1
    %s1822 = scalar_lea.sflag [#allocation6], 1
    %1823 = vsyncpa %s1822, 1
    %1824 = vsyncpa [#allocation9], 1
    %1825 = vsyncpa [#allocation12], 1
    %1826 = vsyncpa [#allocation4], 1
    %s1827 = scalar_lea.sflag [#allocation4], 1
    %1828 = vsyncpa %s1827, 1

</llo_original>
